<compile_context>
chip_gen: v6e
topology: v6e:2x2x1
jax: 0.10.0
libtpu: 0.0.40
codegen_flags: <defaults>
</compile_context>

<pallas_src>
import functools

import jax
import jax.numpy as jnp
from jax import lax
from jax.experimental import pallas as pl
from jax.experimental.pallas import tpu as pltpu


# ----------------------------------------------------------------------------
# Fused kernel: Indexer16 logits + Encoder + Codebook argmin, one row tile / step
#   xi:(tm,K1) im2col rows      iw1:(K1,H1) ib1:(1,H1) iw2:(H1,Nc) ib2:(1,Nc)
#   xe:(tm,K2) patchified rows  ew1:(K2,H2) eb1:(1,H2) ew2:(H2,D)  eb2:(1,D)
#   cb:(Kc,D)  e2:(Kc,1)=||e_k||^2 (precomputed in wrapper)
#   logits:(tm,Nc)  idx:(1,1,tm) int32 (lane-dense)
# ----------------------------------------------------------------------------
def _fused_kernel(xi_ref, iw1_ref, ib1_ref, iw2_ref, ib2_ref,
                  xe_ref, ew1_ref, eb1_ref, ew2_ref, eb2_ref,
                  cb_ref, e2_ref, logits_ref, idx_ref):
    # ---- Indexer16 path: conv3x3 (as im2col matmul) + ReLU + conv1x1 ----
    h = jnp.dot(xi_ref[...], iw1_ref[...], preferred_element_type=jnp.float32)
    h = jnp.maximum(h + ib1_ref[...], 0.0)                       # hidden never leaves VMEM
    logits = jnp.dot(h, iw2_ref[...], preferred_element_type=jnp.float32) + ib2_ref[...]
    logits_ref[...] = logits.astype(logits_ref.dtype)

    # ---- Encoder path: patch embed + ReLU + 1x1 to latent ----
    e = jnp.dot(xe_ref[...], ew1_ref[...], preferred_element_type=jnp.float32)
    e = jnp.maximum(e + eb1_ref[...], 0.0)
    z = jnp.dot(e, ew2_ref[...], preferred_element_type=jnp.float32) + eb2_ref[...]  # (tm, D)

    # ---- Codebook nearest neighbour (transposed distances, ||z||^2 dropped) ----
    cb = cb_ref[...]                                             # (Kc, D) VMEM-resident
    # A @ B^T form: no in-kernel transpose of codebook or z is materialised.
    scores_t = lax.dot_general(cb, z, (((1,), (1,)), ((), ())),
                               preferred_element_type=jnp.float32)   # (Kc, tm)
    d_t = e2_ref[...] - 2.0 * scores_t                           # argmin_k unchanged
    kc = d_t.shape[0]
    min_d = jnp.min(d_t, axis=0, keepdims=True)                  # (1, tm)
    code_iota = lax.broadcasted_iota(jnp.int32, d_t.shape, 0).astype(jnp.float32)
    cand = jnp.where(d_t <= min_d, code_iota, float(kc))         # first occurrence on ties
    idx = jnp.min(cand, axis=0, keepdims=True).astype(jnp.int32)  # (1, tm)
    idx = jnp.minimum(idx, kc - 1)                               # NaN-input guard
    idx_ref[...] = idx.reshape(1, 1, -1)


def pallas_fused_forward(x_idx, x_enc, p, *, tm):
    """One launch: logits for all rows + codebook indices for all rows."""
    M, K1 = x_idx.shape
    Mz, K2 = x_enc.shape
    assert M == Mz and M % tm == 0, (x_idx.shape, x_enc.shape, tm)
    K1w, H1 = p["idx_w1"].shape
    H1w, Nc = p["idx_w2"].shape
    K2w, H2 = p["enc_w1"].shape
    H2w, D = p["enc_w2"].shape
    Kc, Dc = p["codebook"].shape
    assert K1 == K1w and H1 == H1w and K2 == K2w and H2 == H2w and D == Dc
    grid = M // tm

    logits, idx3 = pl.pallas_call(
        _fused_kernel,
        out_shape=(jax.ShapeDtypeStruct((M, Nc), jnp.float32),
                   jax.ShapeDtypeStruct((grid, 1, tm), jnp.int32)),
        grid_spec=pltpu.PrefetchScalarGridSpec(
            num_scalar_prefetch=0,
            grid=(grid,),
            in_specs=[
                pl.BlockSpec((tm, K1), lambda i: (i, 0)),   # im2col rows (unpadded K1)
                pl.BlockSpec((K1, H1), lambda i: (0, 0)),   # resident indexer weight 1
                pl.BlockSpec((1, H1), lambda i: (0, 0)),
                pl.BlockSpec((H1, Nc), lambda i: (0, 0)),   # resident indexer weight 2
                pl.BlockSpec((1, Nc), lambda i: (0, 0)),
                pl.BlockSpec((tm, K2), lambda i: (i, 0)),   # patch rows (unpadded K2)
                pl.BlockSpec((K2, H2), lambda i: (0, 0)),   # resident encoder weight 1
                pl.BlockSpec((1, H2), lambda i: (0, 0)),
                pl.BlockSpec((H2, D), lambda i: (0, 0)),    # resident encoder weight 2
                pl.BlockSpec((1, D), lambda i: (0, 0)),
                pl.BlockSpec((Kc, D), lambda i: (0, 0)),    # resident codebook
                pl.BlockSpec((Kc, 1), lambda i: (0, 0)),    # precomputed ||e_k||^2
            ],
            out_specs=(pl.BlockSpec((tm, Nc), lambda i: (i, 0)),
                       pl.BlockSpec((1, 1, tm), lambda i: (i, 0, 0))),
        ),
        # NOTE(v7x): pltpu.CORE_PARALLEL on this axis (or pl.core_map over a 2-TC mesh)
        # would split the two row tiles across TensorCores explicitly.
        compiler_params=pltpu.CompilerParams(dimension_semantics=("parallel",)),
    )(x_idx, p["idx_w1"], p["idx_b1"], p["idx_w2"], p["idx_b2"],
      x_enc, p["enc_w1"], p["enc_b1"], p["enc_w2"], p["enc_b2"],
      p["codebook"], p["cb_sq"])
    # indices kept int32 (torch argmin would be int64); fine for n_codes < 2^31.
    return logits, idx3.reshape(-1)


# ----------------------------------------------------------------------------
# Plain-JAX glue: im2col / patchify (layout plumbing only, no padding), params
# ----------------------------------------------------------------------------
def im2col_3x3(x_nhwc):
    B, H, W, C = x_nhwc.shape
    xp = jnp.pad(x_nhwc, ((0, 0), (1, 1), (1, 1), (0, 0)))
    cols = jnp.concatenate(
        [xp[:, dh:dh + H, dw:dw + W, :] for dh in range(3) for dw in range(3)],
        axis=-1)                                       # (B, H, W, 9*C)
    return cols.reshape(B * H * W, 9 * C)


def patchify(x_nhwc, s):
    B, H, W, C = x_nhwc.shape
    x = x_nhwc.reshape(B, H // s, s, W // s, s, C)
    x = x.transpose(0, 1, 3, 2, 4, 5)
    return x.reshape(B * (H // s) * (W // s), s * s * C)


def _pick_tm(m, preferred=256):
    """Largest power-of-two tile <= preferred dividing m. tm<=256 keeps the (Kc,tm) f32
    VQ-distance tile within vreg budget; >=2 grid steps keeps both v7x TCs busy."""
    tm = min(preferred, m)
    while m % tm != 0 and tm > 8:
        tm //= 2
    assert m % tm == 0, f"row count {m} not divisible by a power-of-two tile"
    return tm


def init_params(key, *, cin, hid, latent_dim, n_codes, patch):
    ks = jax.random.split(key, 8)
    return {
        # Indexer16
        "idx_w1": 0.05 * jax.random.normal(ks[0], (9 * cin, hid), jnp.float32),
        "idx_b1": jnp.zeros((hid,), jnp.float32),
        "idx_w2": 0.05 * jax.random.normal(ks[1], (hid, n_codes), jnp.float32),
        "idx_b2": jnp.zeros((n_codes,), jnp.float32),
        # Encoder
        "enc_w1": 0.05 * jax.random.normal(ks[2], (patch * patch * cin, hid), jnp.float32),
        "enc_b1": jnp.zeros((hid,), jnp.float32),
        "enc_w2": 0.05 * jax.random.normal(ks[3], (hid, latent_dim), jnp.float32),
        "enc_b2": jnp.zeros((latent_dim,), jnp.float32),
        # Codebook (nn.Embedding init: uniform(-1/K, 1/K))
        "codebook": jax.random.uniform(
            ks[4], (n_codes, latent_dim), jnp.float32,
            minval=-1.0 / n_codes, maxval=1.0 / n_codes),
    }


def prepare_params(params):
    """One-time kernel-ready pytree: (1,H) biases, precomputed ||e_k||^2.
    Call ONCE and reuse; keeps all per-call XLA glue out of the forward."""
    cb = params["codebook"]
    return {
        "idx_w1": params["idx_w1"], "idx_b1": params["idx_b1"].reshape(1, -1),
        "idx_w2": params["idx_w2"], "idx_b2": params["idx_b2"].reshape(1, -1),
        "enc_w1": params["enc_w1"], "enc_b1": params["enc_b1"].reshape(1, -1),
        "enc_w2": params["enc_w2"], "enc_b2": params["enc_b2"].reshape(1, -1),
        "codebook": cb,
        "cb_sq": jnp.sum(cb * cb, axis=-1, keepdims=True),   # (Kc, 1)
    }


# ----------------------------------------------------------------------------
# lrGenerator16.forward(lr, gt)
# ----------------------------------------------------------------------------
def lr_generator16_forward(prepared, lr_nchw, gt_nchw, *, patch=4):
    # Indexer input rows (lr resolution) and encoder patch rows (gt / patch resolution).
    lr = jnp.transpose(lr_nchw, (0, 2, 3, 1))              # NCHW -> NHWC
    cols = im2col_3x3(lr)                                   # (M, 9*Cin), no 128-pad
    gt = jnp.transpose(gt_nchw, (0, 2, 3, 1))
    pat = patchify(gt, patch)                               # (Mz, patch*patch*Cin)

    M, Mz = cols.shape[0], pat.shape[0]
    # scale == patch in lrGenerator16, so the logits grid and the latent grid coincide.
    assert M == Mz, (M, Mz)
    # TODO(synk): if M != Mz (scale != patch) split back into two pallas_calls.

    tm = _pick_tm(M, preferred=256)
    logits, gt_indices = pallas_fused_forward(cols, pat, prepared, tm=tm)
    return logits, gt_indices


# ----------------------------------------------------------------------------
if __name__ == "__main__":
    B, CIN = 2, 1
    LR_HW, SCALE = 16, 4
    GT_HW = LR_HW * SCALE
    HID, LATENT, N_CODES, PATCH = 32, 32, 64, 4

    key = jax.random.PRNGKey(0)
    k_lr, k_gt, k_p = jax.random.split(key, 3)
    lr = jax.random.normal(k_lr, (B, CIN, LR_HW, LR_HW), jnp.float32)
    gt = jax.random.normal(k_gt, (B, CIN, GT_HW, GT_HW), jnp.float32)
    params = init_params(k_p, cin=CIN, hid=HID, latent_dim=LATENT,
                         n_codes=N_CODES, patch=PATCH)
    prepared = jax.block_until_ready(prepare_params(params))   # once, outside the forward

    fwd = jax.jit(functools.partial(lr_generator16_forward, patch=PATCH))
    logits, gt_idx = fwd(prepared, lr, gt)
    logits = jax.block_until_ready(logits)
    gt_idx = jax.block_until_ready(gt_idx)

    M = B * LR_HW * LR_HW
    assert logits.shape == (M, N_CODES), logits.shape
    assert gt_idx.shape == (M,) and gt_idx.dtype == jnp.int32, (gt_idx.shape, gt_idx.dtype)

    # --- reference: logits path (pure JAX, f32) ---
    ref_cols = im2col_3x3(jnp.transpose(lr, (0, 2, 3, 1)))
    ref_h1 = jnp.maximum(ref_cols @ params["idx_w1"] + params["idx_b1"], 0.0)
    ref_logits = ref_h1 @ params["idx_w2"] + params["idx_b2"]
    assert jnp.allclose(logits, ref_logits, rtol=1e-2, atol=1e-2)

    # --- reference: encoder + VQ indices (tolerance-based: chosen code is minimal) ---
    ref_pat = patchify(jnp.transpose(gt, (0, 2, 3, 1)), PATCH)
    ref_e1 = jnp.maximum(ref_pat @ params["enc_w1"] + params["enc_b1"], 0.0)
    ref_z = ref_e1 @ params["enc_w2"] + params["enc_b2"]
    e = params["codebook"]
    d_ref = (jnp.sum(ref_z * ref_z, axis=1, keepdims=True)
             + jnp.sum(e * e, axis=1)[None, :]
             - 2.0 * ref_z @ e.T)
    chosen = jnp.take_along_axis(d_ref, gt_idx[:, None], axis=1)[:, 0]
    assert bool(jnp.all((gt_idx >= 0) & (gt_idx < N_CODES)))
    assert bool(jnp.all(chosen <= d_ref.min(axis=1) + 1e-4))

    print("KERNEL_OK")
</pallas_src>

<mosaic_0001>
module attributes {stable_mosaic.version = 11 : i64} {
  func.func @_fused_kernel(%arg0: i32, %arg1: memref<256x9xf32, #tpu.memory_space<vmem>>, %arg2: memref<9x32xf32, #tpu.memory_space<vmem>>, %arg3: memref<1x32xf32, #tpu.memory_space<vmem>>, %arg4: memref<32x64xf32, #tpu.memory_space<vmem>>, %arg5: memref<1x64xf32, #tpu.memory_space<vmem>>, %arg6: memref<256x16xf32, #tpu.memory_space<vmem>>, %arg7: memref<16x32xf32, #tpu.memory_space<vmem>>, %arg8: memref<1x32xf32, #tpu.memory_space<vmem>>, %arg9: memref<32x32xf32, #tpu.memory_space<vmem>>, %arg10: memref<1x32xf32, #tpu.memory_space<vmem>>, %arg11: memref<64x32xf32, #tpu.memory_space<vmem>>, %arg12: memref<64x1xf32, #tpu.memory_space<vmem>>, %arg13: memref<256x64xf32, #tpu.memory_space<vmem>>, %arg14: memref<1x1x256xi32, #tpu.memory_space<vmem>>) attributes {dimension_semantics = [#tpu.dimension_semantics<parallel>], iteration_bounds = array<i64: 2>, scalar_prefetch = 0 : i64, scratch_operands = 0 : i64, tpu.core_type = #tpu.core_type<tc>, window_params = [{transform_indices = @transform_0, window_bounds = array<i64: 256, 9>}, {pipeline_mode = #tpu.pipeline_mode<synchronous>, transform_indices = @transform_1, window_bounds = array<i64: 9, 32>}, {pipeline_mode = #tpu.pipeline_mode<synchronous>, transform_indices = @transform_2, window_bounds = array<i64: 1, 32>}, {pipeline_mode = #tpu.pipeline_mode<synchronous>, transform_indices = @transform_3, window_bounds = array<i64: 32, 64>}, {pipeline_mode = #tpu.pipeline_mode<synchronous>, transform_indices = @transform_4, window_bounds = array<i64: 1, 64>}, {transform_indices = @transform_5, window_bounds = array<i64: 256, 16>}, {pipeline_mode = #tpu.pipeline_mode<synchronous>, transform_indices = @transform_6, window_bounds = array<i64: 16, 32>}, {pipeline_mode = #tpu.pipeline_mode<synchronous>, transform_indices = @transform_7, window_bounds = array<i64: 1, 32>}, {pipeline_mode = #tpu.pipeline_mode<synchronous>, transform_indices = @transform_8, window_bounds = array<i64: 32, 32>}, {pipeline_mode = #tpu.pipeline_mode<synchronous>, transform_indices = @transform_9, window_bounds = array<i64: 1, 32>}, {pipeline_mode = #tpu.pipeline_mode<synchronous>, transform_indices = @transform_10, window_bounds = array<i64: 64, 32>}, {pipeline_mode = #tpu.pipeline_mode<synchronous>, transform_indices = @transform_11, window_bounds = array<i64: 64, 1>}, {transform_indices = @transform_12, window_bounds = array<i64: 256, 64>}, {transform_indices = @transform_13, window_bounds = array<i64: 1, 1, 256>}]} {
    %c0 = arith.constant 0 : index
    %c0_0 = arith.constant 0 : index
    %0 = vector.load %arg1[%c0, %c0_0] : memref<256x9xf32, #tpu.memory_space<vmem>>, vector<256x9xf32>
    %c0_1 = arith.constant 0 : index
    %c0_2 = arith.constant 0 : index
    %1 = vector.load %arg2[%c0_1, %c0_2] : memref<9x32xf32, #tpu.memory_space<vmem>>, vector<9x32xf32>
    %cst = arith.constant dense<0.000000e+00> : vector<256x32xf32>
    %2 = tpu.matmul %0, %1, %cst {dimension_numbers = #tpu.dot_dimension_numbers<[1], [0], [0], [1], [0, 0, 1, 1], [], []>} : vector<256x9xf32>, vector<9x32xf32>, vector<256x32xf32> -> vector<256x32xf32>
    %c0_3 = arith.constant 0 : index
    %c0_4 = arith.constant 0 : index
    %3 = vector.load %arg3[%c0_3, %c0_4] : memref<1x32xf32, #tpu.memory_space<vmem>>, vector<1x32xf32>
    %4 = vector.broadcast %3 : vector<1x32xf32> to vector<256x32xf32>
    %5 = arith.addf %2, %4 : vector<256x32xf32>
    %cst_5 = arith.constant 0.000000e+00 : f32
    %6 = vector.broadcast %cst_5 : f32 to vector<256x32xf32>
    %7 = arith.maximumf %5, %6 : vector<256x32xf32>
    %c0_6 = arith.constant 0 : index
    %c0_7 = arith.constant 0 : index
    %8 = vector.load %arg4[%c0_6, %c0_7] : memref<32x64xf32, #tpu.memory_space<vmem>>, vector<32x64xf32>
    %cst_8 = arith.constant dense<0.000000e+00> : vector<256x64xf32>
    %9 = tpu.matmul %7, %8, %cst_8 {dimension_numbers = #tpu.dot_dimension_numbers<[1], [0], [0], [1], [0, 0, 1, 1], [], []>} : vector<256x32xf32>, vector<32x64xf32>, vector<256x64xf32> -> vector<256x64xf32>
    %c0_9 = arith.constant 0 : index
    %c0_10 = arith.constant 0 : index
    %10 = vector.load %arg5[%c0_9, %c0_10] : memref<1x64xf32, #tpu.memory_space<vmem>>, vector<1x64xf32>
    %11 = vector.broadcast %10 : vector<1x64xf32> to vector<256x64xf32>
    %12 = arith.addf %9, %11 : vector<256x64xf32>
    %c0_11 = arith.constant 0 : index
    %c0_12 = arith.constant 0 : index
    %13 = vector.load %arg13[%c0_11, %c0_12] : memref<256x64xf32, #tpu.memory_space<vmem>>, vector<256x64xf32>
    tpu.vector_store %arg13[%c0_11, %c0_12], %12 {strides = array<i32>} : memref<256x64xf32, #tpu.memory_space<vmem>>, vector<256x64xf32>,
    %c0_13 = arith.constant 0 : index
    %c0_14 = arith.constant 0 : index
    %14 = vector.load %arg6[%c0_13, %c0_14] : memref<256x16xf32, #tpu.memory_space<vmem>>, vector<256x16xf32>
    %c0_15 = arith.constant 0 : index
    %c0_16 = arith.constant 0 : index
    %15 = vector.load %arg7[%c0_15, %c0_16] : memref<16x32xf32, #tpu.memory_space<vmem>>, vector<16x32xf32>
    %cst_17 = arith.constant dense<0.000000e+00> : vector<256x32xf32>
    %16 = tpu.matmul %14, %15, %cst_17 {dimension_numbers = #tpu.dot_dimension_numbers<[1], [0], [0], [1], [0, 0, 1, 1], [], []>} : vector<256x16xf32>, vector<16x32xf32>, vector<256x32xf32> -> vector<256x32xf32>
    %c0_18 = arith.constant 0 : index
    %c0_19 = arith.constant 0 : index
    %17 = vector.load %arg8[%c0_18, %c0_19] : memref<1x32xf32, #tpu.memory_space<vmem>>, vector<1x32xf32>
    %18 = vector.broadcast %17 : vector<1x32xf32> to vector<256x32xf32>
    %19 = arith.addf %16, %18 : vector<256x32xf32>
    %cst_20 = arith.constant 0.000000e+00 : f32
    %20 = vector.broadcast %cst_20 : f32 to vector<256x32xf32>
    %21 = arith.maximumf %19, %20 : vector<256x32xf32>
    %c0_21 = arith.constant 0 : index
    %c0_22 = arith.constant 0 : index
    %22 = vector.load %arg9[%c0_21, %c0_22] : memref<32x32xf32, #tpu.memory_space<vmem>>, vector<32x32xf32>
    %cst_23 = arith.constant dense<0.000000e+00> : vector<256x32xf32>
    %23 = tpu.matmul %21, %22, %cst_23 {dimension_numbers = #tpu.dot_dimension_numbers<[1], [0], [0], [1], [0, 0, 1, 1], [], []>} : vector<256x32xf32>, vector<32x32xf32>, vector<256x32xf32> -> vector<256x32xf32>
    %c0_24 = arith.constant 0 : index
    %c0_25 = arith.constant 0 : index
    %24 = vector.load %arg10[%c0_24, %c0_25] : memref<1x32xf32, #tpu.memory_space<vmem>>, vector<1x32xf32>
    %25 = vector.broadcast %24 : vector<1x32xf32> to vector<256x32xf32>
    %26 = arith.addf %23, %25 : vector<256x32xf32>
    %c0_26 = arith.constant 0 : index
    %c0_27 = arith.constant 0 : index
    %27 = vector.load %arg11[%c0_26, %c0_27] : memref<64x32xf32, #tpu.memory_space<vmem>>, vector<64x32xf32>
    %cst_28 = arith.constant dense<0.000000e+00> : vector<64x256xf32>
    %28 = tpu.matmul %27, %26, %cst_28 {dimension_numbers = #tpu.dot_dimension_numbers<[1], [1], [0], [0], [0, 0, 1, 0], [], []>} : vector<64x32xf32>, vector<256x32xf32>, vector<64x256xf32> -> vector<64x256xf32>
    %c0_29 = arith.constant 0 : index
    %c0_30 = arith.constant 0 : index
    %29 = vector.load %arg12[%c0_29, %c0_30] : memref<64x1xf32, #tpu.memory_space<vmem>>, vector<64x1xf32>
    %cst_31 = arith.constant 2.000000e+00 : f32
    %30 = vector.broadcast %cst_31 : f32 to vector<64x256xf32>
    %31 = arith.mulf %30, %28 : vector<64x256xf32>
    %32 = vector.broadcast %29 : vector<64x1xf32> to vector<64x256xf32>
    %33 = arith.subf %32, %31 : vector<64x256xf32>
    %cst_32 = arith.constant dense<0x7F800000> : vector<256xf32>
    %34 = vector.multi_reduction <minimumf>, %33, %cst_32 [0] : vector<64x256xf32> to vector<256xf32>
    %35 = vector.shape_cast %34 : vector<256xf32> to vector<1x256xf32>
    %36 = tpu.iota {dimensions = array<i32: 0>} : vector<64x256xi32>
    %37 = arith.sitofp %36 : vector<64x256xi32> to vector<64x256xf32>
    %38 = vector.broadcast %35 : vector<1x256xf32> to vector<64x256xf32>
    %39 = arith.cmpf ole, %33, %38 : vector<64x256xf32>
    %cst_33 = arith.constant 6.400000e+01 : f32
    %40 = vector.broadcast %cst_33 : f32 to vector<64x256xf32>
    %41 = arith.select %39, %37, %40 : vector<64x256xi1>, vector<64x256xf32>
    %cst_34 = arith.constant dense<0x7F800000> : vector<256xf32>
    %42 = vector.multi_reduction <minimumf>, %41, %cst_34 [0] : vector<64x256xf32> to vector<256xf32>
    %43 = vector.shape_cast %42 : vector<256xf32> to vector<1x256xf32>
    %44 = arith.fptosi %43 : vector<1x256xf32> to vector<1x256xi32>
    %c63_i32 = arith.constant 63 : i32
    %45 = vector.broadcast %c63_i32 : i32 to vector<1x256xi32>
    %46 = arith.minsi %44, %45 : vector<1x256xi32>
    %47 = vector.shape_cast %46 : vector<1x256xi32> to vector<1x1x256xi32>
    %c0_35 = arith.constant 0 : index
    %c0_36 = arith.constant 0 : index
    %c0_37 = arith.constant 0 : index
    %48 = vector.load %arg14[%c0_35, %c0_36, %c0_37] : memref<1x1x256xi32, #tpu.memory_space<vmem>>, vector<1x1x256xi32>
    tpu.vector_store %arg14[%c0_35, %c0_36, %c0_37], %47 {strides = array<i32>} : memref<1x1x256xi32, #tpu.memory_space<vmem>>, vector<1x1x256xi32>,
    return
  }
  func.func @transform_0(%arg0: i32) -> (i32, i32) {
    %c0_i32 = arith.constant 0 : i32
    %c0_i32_0 = arith.constant 0 : i32
    return %arg0, %c0_i32 : i32, i32
  }
  func.func @transform_1(%arg0: i32) -> (i32, i32) {
    %c0_i32 = arith.constant 0 : i32
    %c0_i32_0 = arith.constant 0 : i32
    %c0_i32_1 = arith.constant 0 : i32
    return %c0_i32, %c0_i32_0 : i32, i32
  }
  func.func @transform_2(%arg0: i32) -> (i32, i32) {
    %c0_i32 = arith.constant 0 : i32
    %c0_i32_0 = arith.constant 0 : i32
    %c0_i32_1 = arith.constant 0 : i32
    return %c0_i32, %c0_i32_0 : i32, i32
  }
  func.func @transform_3(%arg0: i32) -> (i32, i32) {
    %c0_i32 = arith.constant 0 : i32
    %c0_i32_0 = arith.constant 0 : i32
    %c0_i32_1 = arith.constant 0 : i32
    return %c0_i32, %c0_i32_0 : i32, i32
  }
  func.func @transform_4(%arg0: i32) -> (i32, i32) {
    %c0_i32 = arith.constant 0 : i32
    %c0_i32_0 = arith.constant 0 : i32
    %c0_i32_1 = arith.constant 0 : i32
    return %c0_i32, %c0_i32_0 : i32, i32
  }
  func.func @transform_5(%arg0: i32) -> (i32, i32) {
    %c0_i32 = arith.constant 0 : i32
    %c0_i32_0 = arith.constant 0 : i32
    return %arg0, %c0_i32 : i32, i32
  }
  func.func @transform_6(%arg0: i32) -> (i32, i32) {
    %c0_i32 = arith.constant 0 : i32
    %c0_i32_0 = arith.constant 0 : i32
    %c0_i32_1 = arith.constant 0 : i32
    return %c0_i32, %c0_i32_0 : i32, i32
  }
  func.func @transform_7(%arg0: i32) -> (i32, i32) {
    %c0_i32 = arith.constant 0 : i32
    %c0_i32_0 = arith.constant 0 : i32
    %c0_i32_1 = arith.constant 0 : i32
    return %c0_i32, %c0_i32_0 : i32, i32
  }
  func.func @transform_8(%arg0: i32) -> (i32, i32) {
    %c0_i32 = arith.constant 0 : i32
    %c0_i32_0 = arith.constant 0 : i32
    %c0_i32_1 = arith.constant 0 : i32
    return %c0_i32, %c0_i32_0 : i32, i32
  }
  func.func @transform_9(%arg0: i32) -> (i32, i32) {
    %c0_i32 = arith.constant 0 : i32
    %c0_i32_0 = arith.constant 0 : i32
    %c0_i32_1 = arith.constant 0 : i32
    return %c0_i32, %c0_i32_0 : i32, i32
  }
  func.func @transform_10(%arg0: i32) -> (i32, i32) {
    %c0_i32 = arith.constant 0 : i32
    %c0_i32_0 = arith.constant 0 : i32
    %c0_i32_1 = arith.constant 0 : i32
    return %c0_i32, %c0_i32_0 : i32, i32
  }
  func.func @transform_11(%arg0: i32) -> (i32, i32) {
    %c0_i32 = arith.constant 0 : i32
    %c0_i32_0 = arith.constant 0 : i32
    %c0_i32_1 = arith.constant 0 : i32
    return %c0_i32, %c0_i32_0 : i32, i32
  }
  func.func @transform_12(%arg0: i32) -> (i32, i32) {
    %c0_i32 = arith.constant 0 : i32
    %c0_i32_0 = arith.constant 0 : i32
    return %arg0, %c0_i32 : i32, i32
  }
  func.func @transform_13(%arg0: i32) -> (i32, i32, i32) {
    %c0_i32 = arith.constant 0 : i32
    %c0_i32_0 = arith.constant 0 : i32
    %c0_i32_1 = arith.constant 0 : i32
    return %arg0, %c0_i32, %c0_i32_0 : i32, i32, i32
  }
}

</mosaic_0001>

<llo_original>
// kernel: lr_generator16_forward.1
$region0: #{lr_generator16_forward.1}
  #allocation0 [shape = 'u32[]', space=smem, size = 0x4, offset = 0x4, fixed_abs, tag = 'smem constant byte address 0x4 - core index']
  #allocation1 [shape = 'u32[144,128]{1,0:T(1,128)}', space=vmem, size = 0x12000, scoped, tag = 'internal scratch']
  %s0 = inlined_call_operand.vmem [shape: f32[512,9], index: 0, kind: input, shape index: {}]
  %s1 = inlined_call_operand.vmem [shape: f32[9,32], index: 1, kind: input, shape index: {}]
  %s2 = inlined_call_operand.vmem [shape: f32[1,32], index: 2, kind: input, shape index: {}]
  %s3 = inlined_call_operand.vmem [shape: f32[32,64], index: 3, kind: input, shape index: {}]
  %s4 = inlined_call_operand.vmem [shape: f32[1,64], index: 4, kind: input, shape index: {}]
  %s5 = inlined_call_operand.vmem [shape: f32[512,16], index: 5, kind: input, shape index: {}]
  %s6 = inlined_call_operand.vmem [shape: f32[16,32], index: 6, kind: input, shape index: {}]
  %s7 = inlined_call_operand.vmem [shape: f32[1,32], index: 7, kind: input, shape index: {}]
  %s8 = inlined_call_operand.vmem [shape: f32[32,32], index: 8, kind: input, shape index: {}]
  %s9 = inlined_call_operand.vmem [shape: f32[1,32], index: 9, kind: input, shape index: {}]
  %s10 = inlined_call_operand.vmem [shape: f32[64,32], index: 10, kind: input, shape index: {}]
  %s11 = inlined_call_operand.vmem [shape: f32[64,1], index: 11, kind: input, shape index: {}]
  %s12 = inlined_call_operand.vmem [shape: f32[512,64], index: 12, kind: output, shape index: {0}]
  %s13 = inlined_call_operand.hbm [shape: s32[2,1,256], index: 13, kind: output, shape index: {1}]
  %14 = xla_tuple %s12, %s13
  %s15 = sld [smem:[#allocation0]]
  $region89: #{lr_generator16_forward.1} parent=0
    _
  %s17 = ssub.s32 1, %s15
  %s18 = scalar_select 0, %s17, %s15
  $region1: #{lr_generator16_forward.1} parent=0
    #allocation2 [shape = 'u8[2048]{0}', space=vmem, size = 0x800, scoped, tag = 'output window, operand 1']
    #allocation3 [shape = 's32[2]{0}', space=sflag, size = 0x8, scoped, tag = 'scoped memory for lr_generator16_forward.1']
    %19 = vsyncpa [#allocation3], 0
    %s20 = scalar_lea.sflag [#allocation3], 1
    %21 = vsyncpa %s20, 0
    loop: start=0, step=1, limit=4
    $region2: #{lr_generator16_forward.1} parent=1 // loop_pre_header
      _
    $region3: #{lr_generator16_forward.1} parent=1 // loop_header
      %s23 = sphi 0, %s27
      %p24 = scmp.ge.s32.totalorder %s23, 4
      %s33 = sphi 0, %s35
      %s36 = sphi 0, %s33
      %s37 = sphi 0, %s36
      %s53 = sphi 0, %s37
      %s57 = sphi 0, %s57
      %s59 = sphi 0, %s57
      %s60 = sphi 0, %s59
      %s74 = sphi 0, %s60
      %s78 = sphi 0, %s78
      %s80 = sphi 0, %s78
      %s81 = sphi 0, %s80
      %s95 = sphi 0, %s81
      %s99 = sphi 0, %s99
      %s101 = sphi 0, %s99
      %s102 = sphi 0, %s101
      %s116 = sphi 0, %s102
      %s120 = sphi 0, %s120
      %s122 = sphi 0, %s120
      %s123 = sphi 0, %s122
      %s137 = sphi 0, %s123
      %s143 = sphi 0, %s145
      %s146 = sphi 0, %s143
      %s147 = sphi 0, %s146
      %s163 = sphi 0, %s147
      %s167 = sphi 0, %s167
      %s169 = sphi 0, %s167
      %s170 = sphi 0, %s169
      %s184 = sphi 0, %s170
      %s188 = sphi 0, %s188
      %s190 = sphi 0, %s188
      %s191 = sphi 0, %s190
      %s205 = sphi 0, %s191
      %s209 = sphi 0, %s209
      %s211 = sphi 0, %s209
      %s212 = sphi 0, %s211
      %s226 = sphi 0, %s212
      %s230 = sphi 0, %s230
      %s232 = sphi 0, %s230
      %s233 = sphi 0, %s232
      %s247 = sphi 0, %s233
      %s251 = sphi 0, %s251
      %s253 = sphi 0, %s251
      %s254 = sphi 0, %s253
      %s268 = sphi 0, %s254
      %s272 = sphi 0, %s272
      %s274 = sphi 0, %s272
      %s275 = sphi 0, %s274
      %s289 = sphi 0, %s275
      %s295 = sphi 0, %s297
      %s298 = sphi 0, %s295
      %s299 = sphi 0, %s298
      %s315 = sphi 0, %s299
      %s321 = sphi 0, %s323
      %s324 = sphi 0, %s321
      %s325 = sphi 0, %s324
      %s341 = sphi 0, %s325
    $region4: #{lr_generator16_forward.1} parent=1 // loop_header_branch
      %26 = sbr.rel (%p24) target = $region8
    $region5: #{lr_generator16_forward.1} parent=1 // loop_body
      %s28 = ssub.s32 %s23, 1
      %s29 = ssub.s32 %s23, 2
      %s30 = sadd.s32 %s23, 1
      %s31 = ssub.s32 %s23, %s30
      %p32 = scmp.eq.s32.totalorder %s31, 0
      %s34 = sadd.s32 %s33, 1
      %s35 = scalar_select %p32, %s33, %s34
      %p38 = pneg %p32
      %p39 = scmp.eq.s32.totalorder %s23, 1
      %p40 = por %p38, %p39
      %p41 = scmp.ne.s32.totalorder %s33, %s36
      %p42 = scmp.eq.s32.totalorder %s23, 0
      %p43 = por %p41, %p42
      %p44 = scmp.ne.s32.totalorder %s33, %s36
      %p45 = scmp.eq.s32.totalorder %s28, 1
      %p46 = por %p44, %p45
      %p47 = scmp.ne.s32.totalorder %s36, %s37
      %p48 = scmp.eq.s32.totalorder %s28, 0
      %p49 = por %p47, %p48
      %p50 = scmp.ne.s32.totalorder %s36, %s37
      %p51 = scmp.eq.s32.totalorder %s29, 1
      %p52 = por %p50, %p51
      %p54 = scmp.ne.s32.totalorder %s37, %s53
      %p55 = scmp.eq.s32.totalorder %s29, 0
      %p56 = por %p54, %p55
      %s58 = sadd.s32 %s57, 1
      %p61 = scmp.eq.s32.totalorder %s23, 1
      %p62 = scmp.ne.s32.totalorder %s57, %s59
      %p63 = scmp.eq.s32.totalorder %s23, 0
      %p64 = por %p62, %p63
      %p65 = scmp.ne.s32.totalorder %s57, %s59
      %p66 = scmp.eq.s32.totalorder %s28, 1
      %p67 = por %p65, %p66
      %p68 = scmp.ne.s32.totalorder %s59, %s60
      %p69 = scmp.eq.s32.totalorder %s28, 0
      %p70 = por %p68, %p69
      %p71 = scmp.ne.s32.totalorder %s59, %s60
      %p72 = scmp.eq.s32.totalorder %s29, 1
      %p73 = por %p71, %p72
      %p75 = scmp.ne.s32.totalorder %s60, %s74
      %p76 = scmp.eq.s32.totalorder %s29, 0
      %p77 = por %p75, %p76
      %s79 = sadd.s32 %s78, 1
      %p82 = scmp.eq.s32.totalorder %s23, 1
      %p83 = scmp.ne.s32.totalorder %s78, %s80
      %p84 = scmp.eq.s32.totalorder %s23, 0
      %p85 = por %p83, %p84
      %p86 = scmp.ne.s32.totalorder %s78, %s80
      %p87 = scmp.eq.s32.totalorder %s28, 1
      %p88 = por %p86, %p87
      %p89 = scmp.ne.s32.totalorder %s80, %s81
      %p90 = scmp.eq.s32.totalorder %s28, 0
      %p91 = por %p89, %p90
      %p92 = scmp.ne.s32.totalorder %s80, %s81
      %p93 = scmp.eq.s32.totalorder %s29, 1
      %p94 = por %p92, %p93
      %p96 = scmp.ne.s32.totalorder %s81, %s95
      %p97 = scmp.eq.s32.totalorder %s29, 0
      %p98 = por %p96, %p97
      %s100 = sadd.s32 %s99, 1
      %p103 = scmp.eq.s32.totalorder %s23, 1
      %p104 = scmp.ne.s32.totalorder %s99, %s101
      %p105 = scmp.eq.s32.totalorder %s23, 0
      %p106 = por %p104, %p105
      %p107 = scmp.ne.s32.totalorder %s99, %s101
      %p108 = scmp.eq.s32.totalorder %s28, 1
      %p109 = por %p107, %p108
      %p110 = scmp.ne.s32.totalorder %s101, %s102
      %p111 = scmp.eq.s32.totalorder %s28, 0
      %p112 = por %p110, %p111
      %p113 = scmp.ne.s32.totalorder %s101, %s102
      %p114 = scmp.eq.s32.totalorder %s29, 1
      %p115 = por %p113, %p114
      %p117 = scmp.ne.s32.totalorder %s102, %s116
      %p118 = scmp.eq.s32.totalorder %s29, 0
      %p119 = por %p117, %p118
      %s121 = sadd.s32 %s120, 1
      %p124 = scmp.eq.s32.totalorder %s23, 1
      %p125 = scmp.ne.s32.totalorder %s120, %s122
      %p126 = scmp.eq.s32.totalorder %s23, 0
      %p127 = por %p125, %p126
      %p128 = scmp.ne.s32.totalorder %s120, %s122
      %p129 = scmp.eq.s32.totalorder %s28, 1
      %p130 = por %p128, %p129
      %p131 = scmp.ne.s32.totalorder %s122, %s123
      %p132 = scmp.eq.s32.totalorder %s28, 0
      %p133 = por %p131, %p132
      %p134 = scmp.ne.s32.totalorder %s122, %s123
      %p135 = scmp.eq.s32.totalorder %s29, 1
      %p136 = por %p134, %p135
      %p138 = scmp.ne.s32.totalorder %s123, %s137
      %p139 = scmp.eq.s32.totalorder %s29, 0
      %p140 = por %p138, %p139
      %s141 = ssub.s32 %s23, %s30
      %p142 = scmp.eq.s32.totalorder %s141, 0
      %s144 = sadd.s32 %s143, 1
      %s145 = scalar_select %p142, %s143, %s144
      %p148 = pneg %p142
      %p149 = scmp.eq.s32.totalorder %s23, 1
      %p150 = por %p148, %p149
      %p151 = scmp.ne.s32.totalorder %s143, %s146
      %p152 = scmp.eq.s32.totalorder %s23, 0
      %p153 = por %p151, %p152
      %p154 = scmp.ne.s32.totalorder %s143, %s146
      %p155 = scmp.eq.s32.totalorder %s28, 1
      %p156 = por %p154, %p155
      %p157 = scmp.ne.s32.totalorder %s146, %s147
      %p158 = scmp.eq.s32.totalorder %s28, 0
      %p159 = por %p157, %p158
      %p160 = scmp.ne.s32.totalorder %s146, %s147
      %p161 = scmp.eq.s32.totalorder %s29, 1
      %p162 = por %p160, %p161
      %p164 = scmp.ne.s32.totalorder %s147, %s163
      %p165 = scmp.eq.s32.totalorder %s29, 0
      %p166 = por %p164, %p165
      %s168 = sadd.s32 %s167, 1
      %p171 = scmp.eq.s32.totalorder %s23, 1
      %p172 = scmp.ne.s32.totalorder %s167, %s169
      %p173 = scmp.eq.s32.totalorder %s23, 0
      %p174 = por %p172, %p173
      %p175 = scmp.ne.s32.totalorder %s167, %s169
      %p176 = scmp.eq.s32.totalorder %s28, 1
      %p177 = por %p175, %p176
      %p178 = scmp.ne.s32.totalorder %s169, %s170
      %p179 = scmp.eq.s32.totalorder %s28, 0
      %p180 = por %p178, %p179
      %p181 = scmp.ne.s32.totalorder %s169, %s170
      %p182 = scmp.eq.s32.totalorder %s29, 1
      %p183 = por %p181, %p182
      %p185 = scmp.ne.s32.totalorder %s170, %s184
      %p186 = scmp.eq.s32.totalorder %s29, 0
      %p187 = por %p185, %p186
      %s189 = sadd.s32 %s188, 1
      %p192 = scmp.eq.s32.totalorder %s23, 1
      %p193 = scmp.ne.s32.totalorder %s188, %s190
      %p194 = scmp.eq.s32.totalorder %s23, 0
      %p195 = por %p193, %p194
      %p196 = scmp.ne.s32.totalorder %s188, %s190
      %p197 = scmp.eq.s32.totalorder %s28, 1
      %p198 = por %p196, %p197
      %p199 = scmp.ne.s32.totalorder %s190, %s191
      %p200 = scmp.eq.s32.totalorder %s28, 0
      %p201 = por %p199, %p200
      %p202 = scmp.ne.s32.totalorder %s190, %s191
      %p203 = scmp.eq.s32.totalorder %s29, 1
      %p204 = por %p202, %p203
      %p206 = scmp.ne.s32.totalorder %s191, %s205
      %p207 = scmp.eq.s32.totalorder %s29, 0
      %p208 = por %p206, %p207
      %s210 = sadd.s32 %s209, 1
      %p213 = scmp.eq.s32.totalorder %s23, 1
      %p214 = scmp.ne.s32.totalorder %s209, %s211
      %p215 = scmp.eq.s32.totalorder %s23, 0
      %p216 = por %p214, %p215
      %p217 = scmp.ne.s32.totalorder %s209, %s211
      %p218 = scmp.eq.s32.totalorder %s28, 1
      %p219 = por %p217, %p218
      %p220 = scmp.ne.s32.totalorder %s211, %s212
      %p221 = scmp.eq.s32.totalorder %s28, 0
      %p222 = por %p220, %p221
      %p223 = scmp.ne.s32.totalorder %s211, %s212
      %p224 = scmp.eq.s32.totalorder %s29, 1
      %p225 = por %p223, %p224
      %p227 = scmp.ne.s32.totalorder %s212, %s226
      %p228 = scmp.eq.s32.totalorder %s29, 0
      %p229 = por %p227, %p228
      %s231 = sadd.s32 %s230, 1
      %p234 = scmp.eq.s32.totalorder %s23, 1
      %p235 = scmp.ne.s32.totalorder %s230, %s232
      %p236 = scmp.eq.s32.totalorder %s23, 0
      %p237 = por %p235, %p236
      %p238 = scmp.ne.s32.totalorder %s230, %s232
      %p239 = scmp.eq.s32.totalorder %s28, 1
      %p240 = por %p238, %p239
      %p241 = scmp.ne.s32.totalorder %s232, %s233
      %p242 = scmp.eq.s32.totalorder %s28, 0
      %p243 = por %p241, %p242
      %p244 = scmp.ne.s32.totalorder %s232, %s233
      %p245 = scmp.eq.s32.totalorder %s29, 1
      %p246 = por %p244, %p245
      %p248 = scmp.ne.s32.totalorder %s233, %s247
      %p249 = scmp.eq.s32.totalorder %s29, 0
      %p250 = por %p248, %p249
      %s252 = sadd.s32 %s251, 1
      %p255 = scmp.eq.s32.totalorder %s23, 1
      %p256 = scmp.ne.s32.totalorder %s251, %s253
      %p257 = scmp.eq.s32.totalorder %s23, 0
      %p258 = por %p256, %p257
      %p259 = scmp.ne.s32.totalorder %s251, %s253
      %p260 = scmp.eq.s32.totalorder %s28, 1
      %p261 = por %p259, %p260
      %p262 = scmp.ne.s32.totalorder %s253, %s254
      %p263 = scmp.eq.s32.totalorder %s28, 0
      %p264 = por %p262, %p263
      %p265 = scmp.ne.s32.totalorder %s253, %s254
      %p266 = scmp.eq.s32.totalorder %s29, 1
      %p267 = por %p265, %p266
      %p269 = scmp.ne.s32.totalorder %s254, %s268
      %p270 = scmp.eq.s32.totalorder %s29, 0
      %p271 = por %p269, %p270
      %s273 = sadd.s32 %s272, 1
      %p276 = scmp.eq.s32.totalorder %s23, 1
      %p277 = scmp.ne.s32.totalorder %s272, %s274
      %p278 = scmp.eq.s32.totalorder %s23, 0
      %p279 = por %p277, %p278
      %p280 = scmp.ne.s32.totalorder %s272, %s274
      %p281 = scmp.eq.s32.totalorder %s28, 1
      %p282 = por %p280, %p281
      %p283 = scmp.ne.s32.totalorder %s274, %s275
      %p284 = scmp.eq.s32.totalorder %s28, 0
      %p285 = por %p283, %p284
      %p286 = scmp.ne.s32.totalorder %s274, %s275
      %p287 = scmp.eq.s32.totalorder %s29, 1
      %p288 = por %p286, %p287
      %p290 = scmp.ne.s32.totalorder %s275, %s289
      %p291 = scmp.eq.s32.totalorder %s29, 0
      %p292 = por %p290, %p291
      %s293 = ssub.s32 %s23, %s30
      %p294 = scmp.eq.s32.totalorder %s293, 0
      %s296 = sadd.s32 %s295, 1
      %s297 = scalar_select %p294, %s295, %s296
      %p300 = pneg %p294
      %p301 = scmp.eq.s32.totalorder %s23, 1
      %p302 = por %p300, %p301
      %p303 = scmp.ne.s32.totalorder %s295, %s298
      %p304 = scmp.eq.s32.totalorder %s23, 0
      %p305 = por %p303, %p304
      %p306 = scmp.ne.s32.totalorder %s295, %s298
      %p307 = scmp.eq.s32.totalorder %s28, 1
      %p308 = por %p306, %p307
      %p309 = scmp.ne.s32.totalorder %s298, %s299
      %p310 = scmp.eq.s32.totalorder %s28, 0
      %p311 = por %p309, %p310
      %p312 = scmp.ne.s32.totalorder %s298, %s299
      %p313 = scmp.eq.s32.totalorder %s29, 1
      %p314 = por %p312, %p313
      %p316 = scmp.ne.s32.totalorder %s299, %s315
      %p317 = scmp.eq.s32.totalorder %s29, 0
      %p318 = por %p316, %p317
      %s319 = ssub.s32 %s23, %s30
      %p320 = scmp.eq.s32.totalorder %s319, 0
      %s322 = sadd.s32 %s321, 1
      %s323 = scalar_select %p320, %s321, %s322
      %p326 = pneg %p320
      %p327 = scmp.eq.s32.totalorder %s23, 1
      %p328 = por %p326, %p327
      %p329 = scmp.ne.s32.totalorder %s321, %s324
      %p330 = scmp.eq.s32.totalorder %s23, 0
      %p331 = por %p329, %p330
      %p332 = scmp.ne.s32.totalorder %s321, %s324
      %p333 = scmp.eq.s32.totalorder %s28, 1
      %p334 = por %p332, %p333
      %p335 = scmp.ne.s32.totalorder %s324, %s325
      %p336 = scmp.eq.s32.totalorder %s28, 0
      %p337 = por %p335, %p336
      %p338 = scmp.ne.s32.totalorder %s324, %s325
      %p339 = scmp.eq.s32.totalorder %s29, 1
      %p340 = por %p338, %p339
      %p342 = scmp.ne.s32.totalorder %s325, %s341
      %p343 = scmp.eq.s32.totalorder %s29, 0
      %p344 = por %p342, %p343
      %p345 = scmp.le.s32.totalorder 1, %s23
      %p346 = scmp.lt.s32.totalorder %s23, 3
      %p347 = pnand %p345, %p346
      %p348 = pneg %p347
      // Predicated region
      $region9: #{lr_generator16_forward.1} parent=5 // pred_check
        _
      $region10: #{lr_generator16_forward.1} parent=5 // pred_check_branch
        %350 = sbr.rel (%p347) target = $region12
      $region11: #{lr_generator16_forward.1} parent=5 // pred_region
        %s351 = ssub.s32 %s23, 1
        // Predicated region
        $region13: #{lr_generator16_forward.1} parent=11 // pred_check
          %p352 = pneg %p70
        $region14: #{lr_generator16_forward.1} parent=11 // pred_check_branch
          %354 = sbr.rel (%p352) target = $region16
        $region15: #{lr_generator16_forward.1} parent=11 // pred_region
          _
        $region16: #{lr_generator16_forward.1} parent=11 // pred_fallthru
          _
        // Predicated region
        $region17: #{lr_generator16_forward.1} parent=11 // pred_check
          %p355 = pneg %p91
        $region18: #{lr_generator16_forward.1} parent=11 // pred_check_branch
          %357 = sbr.rel (%p355) target = $region20
        $region19: #{lr_generator16_forward.1} parent=11 // pred_region
          _
        $region20: #{lr_generator16_forward.1} parent=11 // pred_fallthru
          _
        // Predicated region
        $region21: #{lr_generator16_forward.1} parent=11 // pred_check
          %p358 = pneg %p112
        $region22: #{lr_generator16_forward.1} parent=11 // pred_check_branch
          %360 = sbr.rel (%p358) target = $region24
        $region23: #{lr_generator16_forward.1} parent=11 // pred_region
          _
        $region24: #{lr_generator16_forward.1} parent=11 // pred_fallthru
          _
        // Predicated region
        $region25: #{lr_generator16_forward.1} parent=11 // pred_check
          %p361 = pneg %p133
        $region26: #{lr_generator16_forward.1} parent=11 // pred_check_branch
          %363 = sbr.rel (%p361) target = $region28
        $region27: #{lr_generator16_forward.1} parent=11 // pred_region
          _
        $region28: #{lr_generator16_forward.1} parent=11 // pred_fallthru
          _
        // Predicated region
        $region29: #{lr_generator16_forward.1} parent=11 // pred_check
          %p364 = pneg %p180
        $region30: #{lr_generator16_forward.1} parent=11 // pred_check_branch
          %366 = sbr.rel (%p364) target = $region32
        $region31: #{lr_generator16_forward.1} parent=11 // pred_region
          _
        $region32: #{lr_generator16_forward.1} parent=11 // pred_fallthru
          _
        // Predicated region
        $region33: #{lr_generator16_forward.1} parent=11 // pred_check
          %p367 = pneg %p201
        $region34: #{lr_generator16_forward.1} parent=11 // pred_check_branch
          %369 = sbr.rel (%p367) target = $region36
        $region35: #{lr_generator16_forward.1} parent=11 // pred_region
          _
        $region36: #{lr_generator16_forward.1} parent=11 // pred_fallthru
          _
        // Predicated region
        $region37: #{lr_generator16_forward.1} parent=11 // pred_check
          %p370 = pneg %p222
        $region38: #{lr_generator16_forward.1} parent=11 // pred_check_branch
          %372 = sbr.rel (%p370) target = $region40
        $region39: #{lr_generator16_forward.1} parent=11 // pred_region
          _
        $region40: #{lr_generator16_forward.1} parent=11 // pred_fallthru
          _
        // Predicated region
        $region41: #{lr_generator16_forward.1} parent=11 // pred_check
          %p373 = pneg %p243
        $region42: #{lr_generator16_forward.1} parent=11 // pred_check_branch
          %375 = sbr.rel (%p373) target = $region44
        $region43: #{lr_generator16_forward.1} parent=11 // pred_region
          _
        $region44: #{lr_generator16_forward.1} parent=11 // pred_fallthru
          _
        // Predicated region
        $region45: #{lr_generator16_forward.1} parent=11 // pred_check
          %p376 = pneg %p264
        $region46: #{lr_generator16_forward.1} parent=11 // pred_check_branch
          %378 = sbr.rel (%p376) target = $region48
        $region47: #{lr_generator16_forward.1} parent=11 // pred_region
          _
        $region48: #{lr_generator16_forward.1} parent=11 // pred_fallthru
          _
        // Predicated region
        $region49: #{lr_generator16_forward.1} parent=11 // pred_check
          %p379 = pneg %p285
        $region50: #{lr_generator16_forward.1} parent=11 // pred_check_branch
          %381 = sbr.rel (%p379) target = $region52
        $region51: #{lr_generator16_forward.1} parent=11 // pred_region
          _
        $region52: #{lr_generator16_forward.1} parent=11 // pred_fallthru
          _
      $region12: #{lr_generator16_forward.1} parent=5 // pred_fallthru
        _
      %p382 = scmp.lt.s32.totalorder %s23, 2
      // Predicated region
      $region53: #{lr_generator16_forward.1} parent=5 // pred_check
        %p383 = pneg %p382
      $region54: #{lr_generator16_forward.1} parent=5 // pred_check_branch
        %385 = sbr.rel (%p383) target = $region56
      $region55: #{lr_generator16_forward.1} parent=5 // pred_region
        // Predicated region
        $region57: #{lr_generator16_forward.1} parent=55 // pred_check
          %p386 = pneg %p43
        $region58: #{lr_generator16_forward.1} parent=55 // pred_check_branch
          %388 = sbr.rel (%p386) target = $region60
        $region59: #{lr_generator16_forward.1} parent=55 // pred_region
          %s389 = smul.u32 32, %s23
          %p390 = scmp.lt.s32.totalorder %s389, 63
          %s391 = scalar_select %p390, %s389, 63
          %s392 = smul.addr %s391, 8
          %s393 = scalar_lea.vmem %s0, %s392
          %s394 = smul.u32 32, %s23
        $region60: #{lr_generator16_forward.1} parent=55 // pred_fallthru
          _
        // Predicated region
        $region61: #{lr_generator16_forward.1} parent=55 // pred_check
          %p395 = pneg %p153
        $region62: #{lr_generator16_forward.1} parent=55 // pred_check_branch
          %397 = sbr.rel (%p395) target = $region64
        $region63: #{lr_generator16_forward.1} parent=55 // pred_region
          %s398 = smul.u32 32, %s23
          %p399 = scmp.lt.s32.totalorder %s398, 63
          %s400 = scalar_select %p399, %s398, 63
          %s401 = smul.addr %s400, 8
          %s402 = scalar_lea.vmem %s5, %s401
          %s403 = smul.u32 32, %s23
        $region64: #{lr_generator16_forward.1} parent=55 // pred_fallthru
          _
      $region56: #{lr_generator16_forward.1} parent=5 // pred_fallthru
        _
      %p404 = scmp.le.s32.totalorder 1, %s23
      %p405 = scmp.lt.s32.totalorder %s23, 3
      %p406 = pnand %p404, %p405
      %p407 = pneg %p406
      // Predicated region
      $region65: #{lr_generator16_forward.1} parent=5 // pred_check
        _
      $region66: #{lr_generator16_forward.1} parent=5 // pred_check_branch
        %409 = sbr.rel (%p406) target = $region68
      $region67: #{lr_generator16_forward.1} parent=5 // pred_region
        %s410 = ssub.s32 %s23, 1
        %s411 = smul.u32 32, %s28
        %p412 = scmp.lt.s32.totalorder %s411, 63
        %s413 = scalar_select %p412, %s411, 63
        %s414 = smul.addr %s413, 8
        %s415 = scalar_lea.vmem %s0, %s414
        %p416 = pneg %p49
        %p417 = pneg %p46
        %p418 = pneg %p70
        %p419 = pneg %p67
        %p420 = pneg %p91
        %p421 = pneg %p88
        %p422 = pneg %p112
        %p423 = pneg %p109
        %p424 = pneg %p133
        %p425 = pneg %p130
        %s426 = smul.u32 32, %s28
        %p427 = scmp.lt.s32.totalorder %s426, 63
        %s428 = scalar_select %p427, %s426, 63
        %s429 = smul.addr %s428, 8
        %s430 = scalar_lea.vmem %s5, %s429
        %p431 = pneg %p159
        %p432 = pneg %p156
        %p433 = pneg %p180
        %p434 = pneg %p177
        %p435 = pneg %p201
        %p436 = pneg %p198
        %p437 = pneg %p222
        %p438 = pneg %p219
        %p439 = pneg %p243
        %p440 = pneg %p240
        %p441 = pneg %p264
        %p442 = pneg %p261
        %p443 = pneg %p285
        %p444 = pneg %p282
        %p445 = pneg %p311
        %p446 = pneg %p308
        %s447 = smul.u32 32, %s28
        %p448 = scmp.lt.s32.totalorder %s447, 63
        %s449 = scalar_select %p448, %s447, 63
        %s450 = smul.addr %s449, 8
        %s451 = scalar_lea.vmem %s12, %s450
        %p452 = pneg %p337
        %p453 = pneg %p334
        %s454 = sand.u32 %s324, 1
        %s455 = scalar_lea.sflag [#allocation3], %s454
        %s456 = sand.u32 %s324, 1
        %s457 = smul.addr %s456, 2
        %s458 = scalar_lea.vmem [#allocation2], %s457
        %s459 = smul.u32 32, %s28
        %p460 = scmp.lt.s32.totalorder %s459, 63
        %s461 = scalar_select %p460, %s459, 63
        %s462 = smul.addr %s461, 8
        %s463 = scalar_lea.vmem %s0, %s462
        %s464 = smul.u32 32, %s28
        %s465 = smul.u32 32, %s28
        %p466 = scmp.lt.s32.totalorder %s465, 63
        %s467 = scalar_select %p466, %s465, 63
        %s468 = smul.addr %s467, 8
        %s469 = scalar_lea.vmem %s5, %s468
        %s470 = smul.u32 32, %s28
        %s471 = smul.u32 32, %s28
        %p472 = scmp.lt.s32.totalorder %s471, 63
        %s473 = scalar_select %p472, %s471, 63
        %s474 = smul.addr %s473, 8
        %s475 = scalar_lea.vmem %s12, %s474
        %s476 = smul.u32 32, %s28
        %v477 = vld [vmem:[%s463] sm:$0xff]
        %v478 = vld [vmem:[%s463 + $0x8] sm:$0xff]
        %v479 = vld [vmem:[%s463 + $0x10] sm:$0xff]
        %v480 = vld [vmem:[%s463 + $0x18] sm:$0xff]
        %v481 = vld [vmem:[%s463 + $0x20] sm:$0xff]
        %v482 = vld [vmem:[%s463 + $0x28] sm:$0xff]
        %v483 = vld [vmem:[%s463 + $0x30] sm:$0xff]
        %v484 = vld [vmem:[%s463 + $0x38] sm:$0xff]
        %v485 = vld [vmem:[%s463 + $0x40] sm:$0xff]
        %v486 = vld [vmem:[%s463 + $0x48] sm:$0xff]
        %v487 = vld [vmem:[%s463 + $0x50] sm:$0xff]
        %v488 = vld [vmem:[%s463 + $0x58] sm:$0xff]
        %v489 = vld [vmem:[%s463 + $0x60] sm:$0xff]
        %v490 = vld [vmem:[%s463 + $0x68] sm:$0xff]
        %v491 = vld [vmem:[%s463 + $0x70] sm:$0xff]
        %v492 = vld [vmem:[%s463 + $0x78] sm:$0xff]
        %v493 = vld [vmem:[%s463 + $0x80] sm:$0xff]
        %v494 = vld [vmem:[%s463 + $0x88] sm:$0xff]
        %v495 = vld [vmem:[%s463 + $0x90] sm:$0xff]
        %v496 = vld [vmem:[%s463 + $0x98] sm:$0xff]
        %v497 = vld [vmem:[%s463 + $0xa0] sm:$0xff]
        %v498 = vld [vmem:[%s463 + $0xa8] sm:$0xff]
        %v499 = vld [vmem:[%s463 + $0xb0] sm:$0xff]
        %v500 = vld [vmem:[%s463 + $0xb8] sm:$0xff]
        %v501 = vld [vmem:[%s463 + $0xc0] sm:$0xff]
        %v502 = vld [vmem:[%s463 + $0xc8] sm:$0xff]
        %v503 = vld [vmem:[%s463 + $0xd0] sm:$0xff]
        %v504 = vld [vmem:[%s463 + $0xd8] sm:$0xff]
        %v505 = vld [vmem:[%s463 + $0xe0] sm:$0xff]
        %v506 = vld [vmem:[%s463 + $0xe8] sm:$0xff]
        %v507 = vld [vmem:[%s463 + $0xf0] sm:$0xff]
        %v508 = vld [vmem:[%s463 + $0xf8] sm:$0xff]
        %v509 = vld [vmem:[%s1] sm:$0xff]
        %v510 = vld [vmem:[%s1 + $0x8] sm:$0x1]
        %v511 = vld [vmem:[%s2] sm:$0x1]
        %v513 = vlaneseq
        %v514 = vshrl.u32 %v513, 7
        %v515 = vsub.s32 0, %v514
        %v516 = vrot.slane %v511, %v515
        %vm518 = vcmask 72704
        %v520 = vsel %vm518, %v477, 0
        %v523 = vsel %vm518, %v478, 0
        %v526 = vsel %vm518, %v479, 0
        %v529 = vsel %vm518, %v480, 0
        %v532 = vsel %vm518, %v481, 0
        %v535 = vsel %vm518, %v482, 0
        %v538 = vsel %vm518, %v483, 0
        %v541 = vsel %vm518, %v484, 0
        %v544 = vsel %vm518, %v485, 0
        %v547 = vsel %vm518, %v486, 0
        %v550 = vsel %vm518, %v487, 0
        %v553 = vsel %vm518, %v488, 0
        %v556 = vsel %vm518, %v489, 0
        %v559 = vsel %vm518, %v490, 0
        %v562 = vsel %vm518, %v491, 0
        %v565 = vsel %vm518, %v492, 0
        %v568 = vsel %vm518, %v493, 0
        %v571 = vsel %vm518, %v494, 0
        %v574 = vsel %vm518, %v495, 0
        %v577 = vsel %vm518, %v496, 0
        %v580 = vsel %vm518, %v497, 0
        %v583 = vsel %vm518, %v498, 0
        %v586 = vsel %vm518, %v499, 0
        %v589 = vsel %vm518, %v500, 0
        %v592 = vsel %vm518, %v501, 0
        %v595 = vsel %vm518, %v502, 0
        %v598 = vsel %vm518, %v503, 0
        %v601 = vsel %vm518, %v504, 0
        %v604 = vsel %vm518, %v505, 0
        %v607 = vsel %vm518, %v506, 0
        %v610 = vsel %vm518, %v507, 0
        %v613 = vsel %vm518, %v508, 0
        %vm615 = vcmask 1040384
        %v617 = vsel %vm615, %v510, 0
        %619 = vmatprep.subr.mxu0 0.0
        %620 = vmatpush1.msra.mxu0 0.0
        %621 = vmatprep.subr.mxu0 0.0
        %622 = vmatpush1.msra.mxu0 0.0
        %623 = vmatprep.subr.mxu0 0.0
        %624 = vmatpush1.msra.mxu0 0.0
        %625 = vmatprep.subr.mxu0 0.0
        %626 = vmatpush1.msra.mxu0 0.0
        %627 = vmatprep.subr.mxu0 0.0
        %628 = vmatpush1.msra.mxu0 0.0
        %629 = vmatprep.subr.mxu0 0.0
        %630 = vmatpush1.msra.mxu0 0.0
        %631 = vmatprep.subr.mxu0 0.0
        %632 = vmatpush1.msra.mxu0 0.0
        %633 = vmatprep.subr.mxu0 0.0
        %634 = vmatpush1.msra.mxu0 0.0
        %635 = vmatprep.subr.mxu0 0.0
        %636 = vmatpush1.msra.mxu0 0.0
        %637 = vmatprep.subr.mxu0 0.0
        %638 = vmatpush1.msra.mxu0 0.0
        %639 = vmatprep.subr.mxu0 0.0
        %640 = vmatpush1.msra.mxu0 0.0
        %641 = vmatprep.subr.mxu0 0.0
        %642 = vmatpush1.msra.mxu0 0.0
        %643 = vmatprep.subr.mxu0 0.0
        %644 = vmatpush1.msra.mxu0 0.0
        %645 = vmatprep.subr.mxu0 0.0
        %646 = vmatpush1.msra.mxu0 0.0
        %647 = vmatprep.subr.mxu0 0.0
        %648 = vmatpush1.msra.mxu0 %v617
        %649 = vmatprep.subr.mxu0 0.0
        %650 = vmatpush1.msra.mxu0 %v509
        %651 = vmatprep.subr.mxu0 0.0
        %652 = vmatpush2.msra.mxu0 0.0
        %653 = vmatprep.subr.mxu0 0.0
        %654 = vmatpush2.msra.mxu0 0.0
        %655 = vmatprep.subr.mxu0 0.0
        %656 = vmatpush2.msra.mxu0 0.0
        %657 = vmatprep.subr.mxu0 0.0
        %658 = vmatpush2.msra.mxu0 0.0
        %659 = vmatprep.subr.mxu0 0.0
        %660 = vmatpush2.msra.mxu0 0.0
        %661 = vmatprep.subr.mxu0 0.0
        %662 = vmatpush2.msra.mxu0 0.0
        %663 = vmatprep.subr.mxu0 0.0
        %664 = vmatpush2.msra.mxu0 0.0
        %665 = vmatprep.subr.mxu0 0.0
        %666 = vmatpush2.msra.mxu0 0.0
        %667 = vmatprep.subr.mxu0 0.0
        %668 = vmatpush2.msra.mxu0 0.0
        %669 = vmatprep.subr.mxu0 0.0
        %670 = vmatpush2.msra.mxu0 0.0
        %671 = vmatprep.subr.mxu0 0.0
        %672 = vmatpush2.msra.mxu0 0.0
        %673 = vmatprep.subr.mxu0 0.0
        %674 = vmatpush2.msra.mxu0 0.0
        %675 = vmatprep.subr.mxu0 0.0
        %676 = vmatpush2.msra.mxu0 0.0
        %677 = vmatprep.subr.mxu0 0.0
        %678 = vmatpush2.msra.mxu0 0.0
        %679 = vmatprep.subr.mxu0 0.0
        %680 = vmatpush2.msra.mxu0 0.0
        %681 = vmatprep.subr.mxu0 0.0
        %682 = vmatpush2.msra.mxu0 0.0
        %683 = vmatprep.mubr.f32.mxu0 0.0
        %684 = vmatmul.mubr.f32.gmra.mxu0 %v520
        %v685 = vpop.f32.mrf.mxu0
        %v686 = vadd.f32 %v516, %v685
        %v687 = vpop.f32.mrf.mxu0
        %688 = vmatprep.mubr.f32.mxu0 0.0
        %689 = vmatmul.mubr.f32.gmra.mxu0 %v523
        %v690 = vpop.f32.mrf.mxu0
        %v691 = vadd.f32 %v516, %v690
        %v692 = vpop.f32.mrf.mxu0
        %693 = vmatprep.mubr.f32.mxu0 0.0
        %694 = vmatmul.mubr.f32.gmra.mxu0 %v526
        %v695 = vpop.f32.mrf.mxu0
        %v696 = vadd.f32 %v516, %v695
        %v697 = vpop.f32.mrf.mxu0
        %698 = vmatprep.mubr.f32.mxu0 0.0
        %699 = vmatmul.mubr.f32.gmra.mxu0 %v529
        %v700 = vpop.f32.mrf.mxu0
        %v701 = vadd.f32 %v516, %v700
        %v702 = vpop.f32.mrf.mxu0
        %703 = vmatprep.mubr.f32.mxu0 0.0
        %704 = vmatmul.mubr.f32.gmra.mxu0 %v532
        %v705 = vpop.f32.mrf.mxu0
        %v706 = vadd.f32 %v516, %v705
        %v707 = vpop.f32.mrf.mxu0
        %708 = vmatprep.mubr.f32.mxu0 0.0
        %709 = vmatmul.mubr.f32.gmra.mxu0 %v535
        %v710 = vpop.f32.mrf.mxu0
        %v711 = vadd.f32 %v516, %v710
        %v712 = vpop.f32.mrf.mxu0
        %713 = vmatprep.mubr.f32.mxu0 0.0
        %714 = vmatmul.mubr.f32.gmra.mxu0 %v538
        %v715 = vpop.f32.mrf.mxu0
        %v716 = vadd.f32 %v516, %v715
        %v717 = vpop.f32.mrf.mxu0
        %718 = vmatprep.mubr.f32.mxu0 0.0
        %719 = vmatmul.mubr.f32.gmra.mxu0 %v541
        %v720 = vpop.f32.mrf.mxu0
        %v721 = vadd.f32 %v516, %v720
        %v722 = vpop.f32.mrf.mxu0
        %723 = vmatprep.mubr.f32.mxu0 0.0
        %724 = vmatmul.mubr.f32.gmra.mxu0 %v544
        %v725 = vpop.f32.mrf.mxu0
        %v726 = vadd.f32 %v516, %v725
        %v727 = vpop.f32.mrf.mxu0
        %728 = vmatprep.mubr.f32.mxu0 0.0
        %729 = vmatmul.mubr.f32.gmra.mxu0 %v547
        %v730 = vpop.f32.mrf.mxu0
        %v731 = vadd.f32 %v516, %v730
        %v732 = vpop.f32.mrf.mxu0
        %733 = vmatprep.mubr.f32.mxu0 0.0
        %734 = vmatmul.mubr.f32.gmra.mxu0 %v550
        %v735 = vpop.f32.mrf.mxu0
        %v736 = vadd.f32 %v516, %v735
        %v737 = vpop.f32.mrf.mxu0
        %738 = vmatprep.mubr.f32.mxu0 0.0
        %739 = vmatmul.mubr.f32.gmra.mxu0 %v553
        %v740 = vpop.f32.mrf.mxu0
        %v741 = vadd.f32 %v516, %v740
        %v742 = vpop.f32.mrf.mxu0
        %743 = vmatprep.mubr.f32.mxu0 0.0
        %744 = vmatmul.mubr.f32.gmra.mxu0 %v556
        %v745 = vpop.f32.mrf.mxu0
        %v746 = vadd.f32 %v516, %v745
        %v747 = vpop.f32.mrf.mxu0
        %748 = vmatprep.mubr.f32.mxu0 0.0
        %749 = vmatmul.mubr.f32.gmra.mxu0 %v559
        %v750 = vpop.f32.mrf.mxu0
        %v751 = vadd.f32 %v516, %v750
        %v752 = vpop.f32.mrf.mxu0
        %753 = vmatprep.mubr.f32.mxu0 0.0
        %754 = vmatmul.mubr.f32.gmra.mxu0 %v562
        %v755 = vpop.f32.mrf.mxu0
        %v756 = vadd.f32 %v516, %v755
        %v757 = vpop.f32.mrf.mxu0
        %758 = vmatprep.mubr.f32.mxu0 0.0
        %759 = vmatmul.mubr.f32.gmra.mxu0 %v565
        %v760 = vpop.f32.mrf.mxu0
        %v761 = vadd.f32 %v516, %v760
        %v762 = vpop.f32.mrf.mxu0
        %763 = vmatprep.mubr.f32.mxu0 0.0
        %764 = vmatmul.mubr.f32.gmra.mxu0 %v568
        %v765 = vpop.f32.mrf.mxu0
        %v766 = vadd.f32 %v516, %v765
        %v767 = vpop.f32.mrf.mxu0
        %768 = vmatprep.mubr.f32.mxu0 0.0
        %769 = vmatmul.mubr.f32.gmra.mxu0 %v571
        %v770 = vpop.f32.mrf.mxu0
        %v771 = vadd.f32 %v516, %v770
        %v772 = vpop.f32.mrf.mxu0
        %773 = vmatprep.mubr.f32.mxu0 0.0
        %774 = vmatmul.mubr.f32.gmra.mxu0 %v574
        %v775 = vpop.f32.mrf.mxu0
        %v776 = vadd.f32 %v516, %v775
        %v777 = vpop.f32.mrf.mxu0
        %778 = vmatprep.mubr.f32.mxu0 0.0
        %779 = vmatmul.mubr.f32.gmra.mxu0 %v577
        %v780 = vpop.f32.mrf.mxu0
        %v781 = vadd.f32 %v516, %v780
        %v782 = vpop.f32.mrf.mxu0
        %783 = vmatprep.mubr.f32.mxu0 0.0
        %784 = vmatmul.mubr.f32.gmra.mxu0 %v580
        %v785 = vpop.f32.mrf.mxu0
        %v786 = vadd.f32 %v516, %v785
        %v787 = vpop.f32.mrf.mxu0
        %788 = vmatprep.mubr.f32.mxu0 0.0
        %789 = vmatmul.mubr.f32.gmra.mxu0 %v583
        %v790 = vpop.f32.mrf.mxu0
        %v791 = vadd.f32 %v516, %v790
        %v792 = vpop.f32.mrf.mxu0
        %793 = vmatprep.mubr.f32.mxu0 0.0
        %794 = vmatmul.mubr.f32.gmra.mxu0 %v586
        %v795 = vpop.f32.mrf.mxu0
        %v796 = vadd.f32 %v516, %v795
        %v797 = vpop.f32.mrf.mxu0
        %798 = vmatprep.mubr.f32.mxu0 0.0
        %799 = vmatmul.mubr.f32.gmra.mxu0 %v589
        %v800 = vpop.f32.mrf.mxu0
        %v801 = vadd.f32 %v516, %v800
        %v802 = vpop.f32.mrf.mxu0
        %803 = vmatprep.mubr.f32.mxu0 0.0
        %804 = vmatmul.mubr.f32.gmra.mxu0 %v592
        %v805 = vpop.f32.mrf.mxu0
        %v806 = vadd.f32 %v516, %v805
        %v807 = vpop.f32.mrf.mxu0
        %808 = vmatprep.mubr.f32.mxu0 0.0
        %809 = vmatmul.mubr.f32.gmra.mxu0 %v595
        %v810 = vpop.f32.mrf.mxu0
        %v811 = vadd.f32 %v516, %v810
        %v812 = vpop.f32.mrf.mxu0
        %813 = vmatprep.mubr.f32.mxu0 0.0
        %814 = vmatmul.mubr.f32.gmra.mxu0 %v598
        %v815 = vpop.f32.mrf.mxu0
        %v816 = vadd.f32 %v516, %v815
        %v817 = vpop.f32.mrf.mxu0
        %818 = vmatprep.mubr.f32.mxu0 0.0
        %819 = vmatmul.mubr.f32.gmra.mxu0 %v601
        %v820 = vpop.f32.mrf.mxu0
        %v821 = vadd.f32 %v516, %v820
        %v822 = vpop.f32.mrf.mxu0
        %823 = vmatprep.mubr.f32.mxu0 0.0
        %824 = vmatmul.mubr.f32.gmra.mxu0 %v604
        %v825 = vpop.f32.mrf.mxu0
        %v826 = vadd.f32 %v516, %v825
        %v827 = vpop.f32.mrf.mxu0
        %828 = vmatprep.mubr.f32.mxu0 0.0
        %829 = vmatmul.mubr.f32.gmra.mxu0 %v607
        %v830 = vpop.f32.mrf.mxu0
        %v831 = vadd.f32 %v516, %v830
        %v832 = vpop.f32.mrf.mxu0
        %833 = vmatprep.mubr.f32.mxu0 0.0
        %834 = vmatmul.mubr.f32.gmra.mxu0 %v610
        %v835 = vpop.f32.mrf.mxu0
        %v836 = vadd.f32 %v516, %v835
        %v837 = vpop.f32.mrf.mxu0
        %838 = vmatprep.mubr.f32.mxu0 0.0
        %839 = vmatmul.mubr.f32.gmra.mxu0 %v613
        %v840 = vpop.f32.mrf.mxu0
        %v841 = vadd.f32 %v516, %v840
        %v842 = vpop.f32.mrf.mxu0
        %843 = vdwg.mxu0
        %v844 = vmax.f32 %v686, 0.0
        %v845 = vmax.f32 %v691, 0.0
        %v846 = vmax.f32 %v696, 0.0
        %v847 = vmax.f32 %v701, 0.0
        %v848 = vmax.f32 %v706, 0.0
        %v849 = vmax.f32 %v711, 0.0
        %v850 = vmax.f32 %v716, 0.0
        %v851 = vmax.f32 %v721, 0.0
        %v852 = vmax.f32 %v726, 0.0
        %v853 = vmax.f32 %v731, 0.0
        %v854 = vmax.f32 %v736, 0.0
        %v855 = vmax.f32 %v741, 0.0
        %v856 = vmax.f32 %v746, 0.0
        %v857 = vmax.f32 %v751, 0.0
        %v858 = vmax.f32 %v756, 0.0
        %v859 = vmax.f32 %v761, 0.0
        %v860 = vmax.f32 %v766, 0.0
        %v861 = vmax.f32 %v771, 0.0
        %v862 = vmax.f32 %v776, 0.0
        %v863 = vmax.f32 %v781, 0.0
        %v864 = vmax.f32 %v786, 0.0
        %v865 = vmax.f32 %v791, 0.0
        %v866 = vmax.f32 %v796, 0.0
        %v867 = vmax.f32 %v801, 0.0
        %v868 = vmax.f32 %v806, 0.0
        %v869 = vmax.f32 %v811, 0.0
        %v870 = vmax.f32 %v816, 0.0
        %v871 = vmax.f32 %v821, 0.0
        %v872 = vmax.f32 %v826, 0.0
        %v873 = vmax.f32 %v831, 0.0
        %v874 = vmax.f32 %v836, 0.0
        %v875 = vmax.f32 %v841, 0.0
        %v876 = vld [vmem:[%s3] sm:$0xff]
        %v877 = vld [vmem:[%s3 + $0x8] sm:$0xff]
        %v878 = vld [vmem:[%s3 + $0x10] sm:$0xff]
        %v879 = vld [vmem:[%s3 + $0x18] sm:$0xff]
        %v880 = vld [vmem:[%s4] sm:$0x1]
        %v882 = vlaneseq
        %v883 = vshrl.u32 %v882, 7
        %v884 = vsub.s32 0, %v883
        %v885 = vrot.slane %v880, %v884
        %vm887 = vcmask 261120
        %v889 = vsel %vm887, %v844, 0
        %v892 = vsel %vm887, %v845, 0
        %v895 = vsel %vm887, %v846, 0
        %v898 = vsel %vm887, %v847, 0
        %v901 = vsel %vm887, %v848, 0
        %v904 = vsel %vm887, %v849, 0
        %v907 = vsel %vm887, %v850, 0
        %v910 = vsel %vm887, %v851, 0
        %v913 = vsel %vm887, %v852, 0
        %v916 = vsel %vm887, %v853, 0
        %v919 = vsel %vm887, %v854, 0
        %v922 = vsel %vm887, %v855, 0
        %v925 = vsel %vm887, %v856, 0
        %v928 = vsel %vm887, %v857, 0
        %v931 = vsel %vm887, %v858, 0
        %v934 = vsel %vm887, %v859, 0
        %v937 = vsel %vm887, %v860, 0
        %v940 = vsel %vm887, %v861, 0
        %v943 = vsel %vm887, %v862, 0
        %v946 = vsel %vm887, %v863, 0
        %v949 = vsel %vm887, %v864, 0
        %v952 = vsel %vm887, %v865, 0
        %v955 = vsel %vm887, %v866, 0
        %v958 = vsel %vm887, %v867, 0
        %v961 = vsel %vm887, %v868, 0
        %v964 = vsel %vm887, %v869, 0
        %v967 = vsel %vm887, %v870, 0
        %v970 = vsel %vm887, %v871, 0
        %v973 = vsel %vm887, %v872, 0
        %v976 = vsel %vm887, %v873, 0
        %v979 = vsel %vm887, %v874, 0
        %v982 = vsel %vm887, %v875, 0
        %984 = vmatprep.subr.mxu0 0.0
        %985 = vmatpush1.msra.mxu0 0.0
        %986 = vmatprep.subr.mxu0 0.0
        %987 = vmatpush1.msra.mxu0 0.0
        %988 = vmatprep.subr.mxu0 0.0
        %989 = vmatpush1.msra.mxu0 0.0
        %990 = vmatprep.subr.mxu0 0.0
        %991 = vmatpush1.msra.mxu0 0.0
        %992 = vmatprep.subr.mxu0 0.0
        %993 = vmatpush1.msra.mxu0 0.0
        %994 = vmatprep.subr.mxu0 0.0
        %995 = vmatpush1.msra.mxu0 0.0
        %996 = vmatprep.subr.mxu0 0.0
        %997 = vmatpush1.msra.mxu0 0.0
        %998 = vmatprep.subr.mxu0 0.0
        %999 = vmatpush1.msra.mxu0 0.0
        %1000 = vmatprep.subr.mxu0 0.0
        %1001 = vmatpush1.msra.mxu0 0.0
        %1002 = vmatprep.subr.mxu0 0.0
        %1003 = vmatpush1.msra.mxu0 0.0
        %1004 = vmatprep.subr.mxu0 0.0
        %1005 = vmatpush1.msra.mxu0 0.0
        %1006 = vmatprep.subr.mxu0 0.0
        %1007 = vmatpush1.msra.mxu0 0.0
        %1008 = vmatprep.subr.mxu0 0.0
        %1009 = vmatpush1.msra.mxu0 %v879
        %1010 = vmatprep.subr.mxu0 0.0
        %1011 = vmatpush1.msra.mxu0 %v878
        %1012 = vmatprep.subr.mxu0 0.0
        %1013 = vmatpush1.msra.mxu0 %v877
        %1014 = vmatprep.subr.mxu0 0.0
        %1015 = vmatpush1.msra.mxu0 %v876
        %1016 = vmatprep.subr.mxu0 0.0
        %1017 = vmatpush2.msra.mxu0 0.0
        %1018 = vmatprep.subr.mxu0 0.0
        %1019 = vmatpush2.msra.mxu0 0.0
        %1020 = vmatprep.subr.mxu0 0.0
        %1021 = vmatpush2.msra.mxu0 0.0
        %1022 = vmatprep.subr.mxu0 0.0
        %1023 = vmatpush2.msra.mxu0 0.0
        %1024 = vmatprep.subr.mxu0 0.0
        %1025 = vmatpush2.msra.mxu0 0.0
        %1026 = vmatprep.subr.mxu0 0.0
        %1027 = vmatpush2.msra.mxu0 0.0
        %1028 = vmatprep.subr.mxu0 0.0
        %1029 = vmatpush2.msra.mxu0 0.0
        %1030 = vmatprep.subr.mxu0 0.0
        %1031 = vmatpush2.msra.mxu0 0.0
        %1032 = vmatprep.subr.mxu0 0.0
        %1033 = vmatpush2.msra.mxu0 0.0
        %1034 = vmatprep.subr.mxu0 0.0
        %1035 = vmatpush2.msra.mxu0 0.0
        %1036 = vmatprep.subr.mxu0 0.0
        %1037 = vmatpush2.msra.mxu0 0.0
        %1038 = vmatprep.subr.mxu0 0.0
        %1039 = vmatpush2.msra.mxu0 0.0
        %1040 = vmatprep.subr.mxu0 0.0
        %1041 = vmatpush2.msra.mxu0 0.0
        %1042 = vmatprep.subr.mxu0 0.0
        %1043 = vmatpush2.msra.mxu0 0.0
        %1044 = vmatprep.subr.mxu0 0.0
        %1045 = vmatpush2.msra.mxu0 0.0
        %1046 = vmatprep.subr.mxu0 0.0
        %1047 = vmatpush2.msra.mxu0 0.0
        %1048 = vmatprep.mubr.f32.mxu0 0.0
        %1049 = vmatmul.mubr.f32.gmra.mxu0 %v889
        %v1050 = vpop.f32.mrf.mxu0
        %v1051 = vadd.f32 %v885, %v1050
        %v1052 = vpop.f32.mrf.mxu0
        %1053 = vmatprep.mubr.f32.mxu0 0.0
        %1054 = vmatmul.mubr.f32.gmra.mxu0 %v892
        %v1055 = vpop.f32.mrf.mxu0
        %v1056 = vadd.f32 %v885, %v1055
        %v1057 = vpop.f32.mrf.mxu0
        %1058 = vmatprep.mubr.f32.mxu0 0.0
        %1059 = vmatmul.mubr.f32.gmra.mxu0 %v895
        %v1060 = vpop.f32.mrf.mxu0
        %v1061 = vadd.f32 %v885, %v1060
        %v1062 = vpop.f32.mrf.mxu0
        %1063 = vmatprep.mubr.f32.mxu0 0.0
        %1064 = vmatmul.mubr.f32.gmra.mxu0 %v898
        %v1065 = vpop.f32.mrf.mxu0
        %v1066 = vadd.f32 %v885, %v1065
        %v1067 = vpop.f32.mrf.mxu0
        %1068 = vmatprep.mubr.f32.mxu0 0.0
        %1069 = vmatmul.mubr.f32.gmra.mxu0 %v901
        %v1070 = vpop.f32.mrf.mxu0
        %v1071 = vadd.f32 %v885, %v1070
        %v1072 = vpop.f32.mrf.mxu0
        %1073 = vmatprep.mubr.f32.mxu0 0.0
        %1074 = vmatmul.mubr.f32.gmra.mxu0 %v904
        %v1075 = vpop.f32.mrf.mxu0
        %v1076 = vadd.f32 %v885, %v1075
        %v1077 = vpop.f32.mrf.mxu0
        %1078 = vmatprep.mubr.f32.mxu0 0.0
        %1079 = vmatmul.mubr.f32.gmra.mxu0 %v907
        %v1080 = vpop.f32.mrf.mxu0
        %v1081 = vadd.f32 %v885, %v1080
        %v1082 = vpop.f32.mrf.mxu0
        %1083 = vmatprep.mubr.f32.mxu0 0.0
        %1084 = vmatmul.mubr.f32.gmra.mxu0 %v910
        %v1085 = vpop.f32.mrf.mxu0
        %v1086 = vadd.f32 %v885, %v1085
        %v1087 = vpop.f32.mrf.mxu0
        %1088 = vmatprep.mubr.f32.mxu0 0.0
        %1089 = vmatmul.mubr.f32.gmra.mxu0 %v913
        %v1090 = vpop.f32.mrf.mxu0
        %v1091 = vadd.f32 %v885, %v1090
        %v1092 = vpop.f32.mrf.mxu0
        %1093 = vmatprep.mubr.f32.mxu0 0.0
        %1094 = vmatmul.mubr.f32.gmra.mxu0 %v916
        %v1095 = vpop.f32.mrf.mxu0
        %v1096 = vadd.f32 %v885, %v1095
        %v1097 = vpop.f32.mrf.mxu0
        %1098 = vmatprep.mubr.f32.mxu0 0.0
        %1099 = vmatmul.mubr.f32.gmra.mxu0 %v919
        %v1100 = vpop.f32.mrf.mxu0
        %v1101 = vadd.f32 %v885, %v1100
        %v1102 = vpop.f32.mrf.mxu0
        %1103 = vmatprep.mubr.f32.mxu0 0.0
        %1104 = vmatmul.mubr.f32.gmra.mxu0 %v922
        %v1105 = vpop.f32.mrf.mxu0
        %v1106 = vadd.f32 %v885, %v1105
        %v1107 = vpop.f32.mrf.mxu0
        %1108 = vmatprep.mubr.f32.mxu0 0.0
        %1109 = vmatmul.mubr.f32.gmra.mxu0 %v925
        %v1110 = vpop.f32.mrf.mxu0
        %v1111 = vadd.f32 %v885, %v1110
        %v1112 = vpop.f32.mrf.mxu0
        %1113 = vmatprep.mubr.f32.mxu0 0.0
        %1114 = vmatmul.mubr.f32.gmra.mxu0 %v928
        %v1115 = vpop.f32.mrf.mxu0
        %v1116 = vadd.f32 %v885, %v1115
        %v1117 = vpop.f32.mrf.mxu0
        %1118 = vmatprep.mubr.f32.mxu0 0.0
        %1119 = vmatmul.mubr.f32.gmra.mxu0 %v931
        %v1120 = vpop.f32.mrf.mxu0
        %v1121 = vadd.f32 %v885, %v1120
        %v1122 = vpop.f32.mrf.mxu0
        %1123 = vmatprep.mubr.f32.mxu0 0.0
        %1124 = vmatmul.mubr.f32.gmra.mxu0 %v934
        %v1125 = vpop.f32.mrf.mxu0
        %v1126 = vadd.f32 %v885, %v1125
        %v1127 = vpop.f32.mrf.mxu0
        %1128 = vmatprep.mubr.f32.mxu0 0.0
        %1129 = vmatmul.mubr.f32.gmra.mxu0 %v937
        %v1130 = vpop.f32.mrf.mxu0
        %v1131 = vadd.f32 %v885, %v1130
        %v1132 = vpop.f32.mrf.mxu0
        %1133 = vmatprep.mubr.f32.mxu0 0.0
        %1134 = vmatmul.mubr.f32.gmra.mxu0 %v940
        %v1135 = vpop.f32.mrf.mxu0
        %v1136 = vadd.f32 %v885, %v1135
        %v1137 = vpop.f32.mrf.mxu0
        %1138 = vmatprep.mubr.f32.mxu0 0.0
        %1139 = vmatmul.mubr.f32.gmra.mxu0 %v943
        %v1140 = vpop.f32.mrf.mxu0
        %v1141 = vadd.f32 %v885, %v1140
        %v1142 = vpop.f32.mrf.mxu0
        %1143 = vmatprep.mubr.f32.mxu0 0.0
        %1144 = vmatmul.mubr.f32.gmra.mxu0 %v946
        %v1145 = vpop.f32.mrf.mxu0
        %v1146 = vadd.f32 %v885, %v1145
        %v1147 = vpop.f32.mrf.mxu0
        %1148 = vmatprep.mubr.f32.mxu0 0.0
        %1149 = vmatmul.mubr.f32.gmra.mxu0 %v949
        %v1150 = vpop.f32.mrf.mxu0
        %v1151 = vadd.f32 %v885, %v1150
        %v1152 = vpop.f32.mrf.mxu0
        %1153 = vmatprep.mubr.f32.mxu0 0.0
        %1154 = vmatmul.mubr.f32.gmra.mxu0 %v952
        %v1155 = vpop.f32.mrf.mxu0
        %v1156 = vadd.f32 %v885, %v1155
        %v1157 = vpop.f32.mrf.mxu0
        %1158 = vmatprep.mubr.f32.mxu0 0.0
        %1159 = vmatmul.mubr.f32.gmra.mxu0 %v955
        %v1160 = vpop.f32.mrf.mxu0
        %v1161 = vadd.f32 %v885, %v1160
        %v1162 = vpop.f32.mrf.mxu0
        %1163 = vmatprep.mubr.f32.mxu0 0.0
        %1164 = vmatmul.mubr.f32.gmra.mxu0 %v958
        %v1165 = vpop.f32.mrf.mxu0
        %v1166 = vadd.f32 %v885, %v1165
        %v1167 = vpop.f32.mrf.mxu0
        %1168 = vmatprep.mubr.f32.mxu0 0.0
        %1169 = vmatmul.mubr.f32.gmra.mxu0 %v961
        %v1170 = vpop.f32.mrf.mxu0
        %v1171 = vadd.f32 %v885, %v1170
        %v1172 = vpop.f32.mrf.mxu0
        %1173 = vmatprep.mubr.f32.mxu0 0.0
        %1174 = vmatmul.mubr.f32.gmra.mxu0 %v964
        %v1175 = vpop.f32.mrf.mxu0
        %v1176 = vadd.f32 %v885, %v1175
        %v1177 = vpop.f32.mrf.mxu0
        %1178 = vmatprep.mubr.f32.mxu0 0.0
        %1179 = vmatmul.mubr.f32.gmra.mxu0 %v967
        %v1180 = vpop.f32.mrf.mxu0
        %v1181 = vadd.f32 %v885, %v1180
        %v1182 = vpop.f32.mrf.mxu0
        %1183 = vmatprep.mubr.f32.mxu0 0.0
        %1184 = vmatmul.mubr.f32.gmra.mxu0 %v970
        %v1185 = vpop.f32.mrf.mxu0
        %v1186 = vadd.f32 %v885, %v1185
        %v1187 = vpop.f32.mrf.mxu0
        %1188 = vmatprep.mubr.f32.mxu0 0.0
        %1189 = vmatmul.mubr.f32.gmra.mxu0 %v973
        %v1190 = vpop.f32.mrf.mxu0
        %v1191 = vadd.f32 %v885, %v1190
        %v1192 = vpop.f32.mrf.mxu0
        %1193 = vmatprep.mubr.f32.mxu0 0.0
        %1194 = vmatmul.mubr.f32.gmra.mxu0 %v976
        %v1195 = vpop.f32.mrf.mxu0
        %v1196 = vadd.f32 %v885, %v1195
        %v1197 = vpop.f32.mrf.mxu0
        %1198 = vmatprep.mubr.f32.mxu0 0.0
        %1199 = vmatmul.mubr.f32.gmra.mxu0 %v979
        %v1200 = vpop.f32.mrf.mxu0
        %v1201 = vadd.f32 %v885, %v1200
        %v1202 = vpop.f32.mrf.mxu0
        %1203 = vmatprep.mubr.f32.mxu0 0.0
        %1204 = vmatmul.mubr.f32.gmra.mxu0 %v982
        %v1205 = vpop.f32.mrf.mxu0
        %v1206 = vadd.f32 %v885, %v1205
        %v1207 = vpop.f32.mrf.mxu0
        %1208 = vdwg.mxu0
        %vm1209 = vcmask 523264
        %1210 = vst.msk [vmem:[%s475] sm:$0xff] %vm1209, %v1051
        %1211 = vst.msk [vmem:[%s475 + $0x8] sm:$0xff] %vm1209, %v1056
        %1212 = vst.msk [vmem:[%s475 + $0x10] sm:$0xff] %vm1209, %v1061
        %1213 = vst.msk [vmem:[%s475 + $0x18] sm:$0xff] %vm1209, %v1066
        %1214 = vst.msk [vmem:[%s475 + $0x20] sm:$0xff] %vm1209, %v1071
        %1215 = vst.msk [vmem:[%s475 + $0x28] sm:$0xff] %vm1209, %v1076
        %1216 = vst.msk [vmem:[%s475 + $0x30] sm:$0xff] %vm1209, %v1081
        %1217 = vst.msk [vmem:[%s475 + $0x38] sm:$0xff] %vm1209, %v1086
        %1218 = vst.msk [vmem:[%s475 + $0x40] sm:$0xff] %vm1209, %v1091
        %1219 = vst.msk [vmem:[%s475 + $0x48] sm:$0xff] %vm1209, %v1096
        %1220 = vst.msk [vmem:[%s475 + $0x50] sm:$0xff] %vm1209, %v1101
        %1221 = vst.msk [vmem:[%s475 + $0x58] sm:$0xff] %vm1209, %v1106
        %1222 = vst.msk [vmem:[%s475 + $0x60] sm:$0xff] %vm1209, %v1111
        %1223 = vst.msk [vmem:[%s475 + $0x68] sm:$0xff] %vm1209, %v1116
        %1224 = vst.msk [vmem:[%s475 + $0x70] sm:$0xff] %vm1209, %v1121
        %1225 = vst.msk [vmem:[%s475 + $0x78] sm:$0xff] %vm1209, %v1126
        %1226 = vst.msk [vmem:[%s475 + $0x80] sm:$0xff] %vm1209, %v1131
        %1227 = vst.msk [vmem:[%s475 + $0x88] sm:$0xff] %vm1209, %v1136
        %1228 = vst.msk [vmem:[%s475 + $0x90] sm:$0xff] %vm1209, %v1141
        %1229 = vst.msk [vmem:[%s475 + $0x98] sm:$0xff] %vm1209, %v1146
        %1230 = vst.msk [vmem:[%s475 + $0xa0] sm:$0xff] %vm1209, %v1151
        %1231 = vst.msk [vmem:[%s475 + $0xa8] sm:$0xff] %vm1209, %v1156
        %1232 = vst.msk [vmem:[%s475 + $0xb0] sm:$0xff] %vm1209, %v1161
        %1233 = vst.msk [vmem:[%s475 + $0xb8] sm:$0xff] %vm1209, %v1166
        %1234 = vst.msk [vmem:[%s475 + $0xc0] sm:$0xff] %vm1209, %v1171
        %1235 = vst.msk [vmem:[%s475 + $0xc8] sm:$0xff] %vm1209, %v1176
        %1236 = vst.msk [vmem:[%s475 + $0xd0] sm:$0xff] %vm1209, %v1181
        %1237 = vst.msk [vmem:[%s475 + $0xd8] sm:$0xff] %vm1209, %v1186
        %1238 = vst.msk [vmem:[%s475 + $0xe0] sm:$0xff] %vm1209, %v1191
        %1239 = vst.msk [vmem:[%s475 + $0xe8] sm:$0xff] %vm1209, %v1196
        %1240 = vst.msk [vmem:[%s475 + $0xf0] sm:$0xff] %vm1209, %v1201
        %1241 = vst.msk [vmem:[%s475 + $0xf8] sm:$0xff] %vm1209, %v1206
        %v1242 = vld [vmem:[%s469] sm:$0xff]
        %v1243 = vld [vmem:[%s469 + $0x8] sm:$0xff]
        %v1244 = vld [vmem:[%s469 + $0x10] sm:$0xff]
        %v1245 = vld [vmem:[%s469 + $0x18] sm:$0xff]
        %v1246 = vld [vmem:[%s469 + $0x20] sm:$0xff]
        %v1247 = vld [vmem:[%s469 + $0x28] sm:$0xff]
        %v1248 = vld [vmem:[%s469 + $0x30] sm:$0xff]
        %v1249 = vld [vmem:[%s469 + $0x38] sm:$0xff]
        %v1250 = vld [vmem:[%s469 + $0x40] sm:$0xff]
        %v1251 = vld [vmem:[%s469 + $0x48] sm:$0xff]
        %v1252 = vld [vmem:[%s469 + $0x50] sm:$0xff]
        %v1253 = vld [vmem:[%s469 + $0x58] sm:$0xff]
        %v1254 = vld [vmem:[%s469 + $0x60] sm:$0xff]
        %v1255 = vld [vmem:[%s469 + $0x68] sm:$0xff]
        %v1256 = vld [vmem:[%s469 + $0x70] sm:$0xff]
        %v1257 = vld [vmem:[%s469 + $0x78] sm:$0xff]
        %v1258 = vld [vmem:[%s469 + $0x80] sm:$0xff]
        %v1259 = vld [vmem:[%s469 + $0x88] sm:$0xff]
        %v1260 = vld [vmem:[%s469 + $0x90] sm:$0xff]
        %v1261 = vld [vmem:[%s469 + $0x98] sm:$0xff]
        %v1262 = vld [vmem:[%s469 + $0xa0] sm:$0xff]
        %v1263 = vld [vmem:[%s469 + $0xa8] sm:$0xff]
        %v1264 = vld [vmem:[%s469 + $0xb0] sm:$0xff]
        %v1265 = vld [vmem:[%s469 + $0xb8] sm:$0xff]
        %v1266 = vld [vmem:[%s469 + $0xc0] sm:$0xff]
        %v1267 = vld [vmem:[%s469 + $0xc8] sm:$0xff]
        %v1268 = vld [vmem:[%s469 + $0xd0] sm:$0xff]
        %v1269 = vld [vmem:[%s469 + $0xd8] sm:$0xff]
        %v1270 = vld [vmem:[%s469 + $0xe0] sm:$0xff]
        %v1271 = vld [vmem:[%s469 + $0xe8] sm:$0xff]
        %v1272 = vld [vmem:[%s469 + $0xf0] sm:$0xff]
        %v1273 = vld [vmem:[%s469 + $0xf8] sm:$0xff]
        %v1274 = vld [vmem:[%s6] sm:$0xff]
        %v1275 = vld [vmem:[%s6 + $0x8] sm:$0xff]
        %v1276 = vld [vmem:[%s7] sm:$0x1]
        %v1278 = vlaneseq
        %v1279 = vshrl.u32 %v1278, 7
        %v1280 = vsub.s32 0, %v1279
        %v1281 = vrot.slane %v1276, %v1280
        %vm1283 = vcmask 130048
        %v1285 = vsel %vm1283, %v1242, 0
        %v1288 = vsel %vm1283, %v1243, 0
        %v1291 = vsel %vm1283, %v1244, 0
        %v1294 = vsel %vm1283, %v1245, 0
        %v1297 = vsel %vm1283, %v1246, 0
        %v1300 = vsel %vm1283, %v1247, 0
        %v1303 = vsel %vm1283, %v1248, 0
        %v1306 = vsel %vm1283, %v1249, 0
        %v1309 = vsel %vm1283, %v1250, 0
        %v1312 = vsel %vm1283, %v1251, 0
        %v1315 = vsel %vm1283, %v1252, 0
        %v1318 = vsel %vm1283, %v1253, 0
        %v1321 = vsel %vm1283, %v1254, 0
        %v1324 = vsel %vm1283, %v1255, 0
        %v1327 = vsel %vm1283, %v1256, 0
        %v1330 = vsel %vm1283, %v1257, 0
        %v1333 = vsel %vm1283, %v1258, 0
        %v1336 = vsel %vm1283, %v1259, 0
        %v1339 = vsel %vm1283, %v1260, 0
        %v1342 = vsel %vm1283, %v1261, 0
        %v1345 = vsel %vm1283, %v1262, 0
        %v1348 = vsel %vm1283, %v1263, 0
        %v1351 = vsel %vm1283, %v1264, 0
        %v1354 = vsel %vm1283, %v1265, 0
        %v1357 = vsel %vm1283, %v1266, 0
        %v1360 = vsel %vm1283, %v1267, 0
        %v1363 = vsel %vm1283, %v1268, 0
        %v1366 = vsel %vm1283, %v1269, 0
        %v1369 = vsel %vm1283, %v1270, 0
        %v1372 = vsel %vm1283, %v1271, 0
        %v1375 = vsel %vm1283, %v1272, 0
        %v1378 = vsel %vm1283, %v1273, 0
        %1380 = vmatprep.subr.mxu0 0.0
        %1381 = vmatpush1.msra.mxu0 0.0
        %1382 = vmatprep.subr.mxu0 0.0
        %1383 = vmatpush1.msra.mxu0 0.0
        %1384 = vmatprep.subr.mxu0 0.0
        %1385 = vmatpush1.msra.mxu0 0.0
        %1386 = vmatprep.subr.mxu0 0.0
        %1387 = vmatpush1.msra.mxu0 0.0
        %1388 = vmatprep.subr.mxu0 0.0
        %1389 = vmatpush1.msra.mxu0 0.0
        %1390 = vmatprep.subr.mxu0 0.0
        %1391 = vmatpush1.msra.mxu0 0.0
        %1392 = vmatprep.subr.mxu0 0.0
        %1393 = vmatpush1.msra.mxu0 0.0
        %1394 = vmatprep.subr.mxu0 0.0
        %1395 = vmatpush1.msra.mxu0 0.0
        %1396 = vmatprep.subr.mxu0 0.0
        %1397 = vmatpush1.msra.mxu0 0.0
        %1398 = vmatprep.subr.mxu0 0.0
        %1399 = vmatpush1.msra.mxu0 0.0
        %1400 = vmatprep.subr.mxu0 0.0
        %1401 = vmatpush1.msra.mxu0 0.0
        %1402 = vmatprep.subr.mxu0 0.0
        %1403 = vmatpush1.msra.mxu0 0.0
        %1404 = vmatprep.subr.mxu0 0.0
        %1405 = vmatpush1.msra.mxu0 0.0
        %1406 = vmatprep.subr.mxu0 0.0
        %1407 = vmatpush1.msra.mxu0 0.0
        %1408 = vmatprep.subr.mxu0 0.0
        %1409 = vmatpush1.msra.mxu0 %v1275
        %1410 = vmatprep.subr.mxu0 0.0
        %1411 = vmatpush1.msra.mxu0 %v1274
        %1412 = vmatprep.subr.mxu0 0.0
        %1413 = vmatpush2.msra.mxu0 0.0
        %1414 = vmatprep.subr.mxu0 0.0
        %1415 = vmatpush2.msra.mxu0 0.0
        %1416 = vmatprep.subr.mxu0 0.0
        %1417 = vmatpush2.msra.mxu0 0.0
        %1418 = vmatprep.subr.mxu0 0.0
        %1419 = vmatpush2.msra.mxu0 0.0
        %1420 = vmatprep.subr.mxu0 0.0
        %1421 = vmatpush2.msra.mxu0 0.0
        %1422 = vmatprep.subr.mxu0 0.0
        %1423 = vmatpush2.msra.mxu0 0.0
        %1424 = vmatprep.subr.mxu0 0.0
        %1425 = vmatpush2.msra.mxu0 0.0
        %1426 = vmatprep.subr.mxu0 0.0
        %1427 = vmatpush2.msra.mxu0 0.0
        %1428 = vmatprep.subr.mxu0 0.0
        %1429 = vmatpush2.msra.mxu0 0.0
        %1430 = vmatprep.subr.mxu0 0.0
        %1431 = vmatpush2.msra.mxu0 0.0
        %1432 = vmatprep.subr.mxu0 0.0
        %1433 = vmatpush2.msra.mxu0 0.0
        %1434 = vmatprep.subr.mxu0 0.0
        %1435 = vmatpush2.msra.mxu0 0.0
        %1436 = vmatprep.subr.mxu0 0.0
        %1437 = vmatpush2.msra.mxu0 0.0
        %1438 = vmatprep.subr.mxu0 0.0
        %1439 = vmatpush2.msra.mxu0 0.0
        %1440 = vmatprep.subr.mxu0 0.0
        %1441 = vmatpush2.msra.mxu0 0.0
        %1442 = vmatprep.subr.mxu0 0.0
        %1443 = vmatpush2.msra.mxu0 0.0
        %1444 = vmatprep.mubr.f32.mxu0 0.0
        %1445 = vmatmul.mubr.f32.gmra.mxu0 %v1285
        %v1446 = vpop.f32.mrf.mxu0
        %v1447 = vadd.f32 %v1281, %v1446
        %v1448 = vpop.f32.mrf.mxu0
        %1449 = vmatprep.mubr.f32.mxu0 0.0
        %1450 = vmatmul.mubr.f32.gmra.mxu0 %v1288
        %v1451 = vpop.f32.mrf.mxu0
        %v1452 = vadd.f32 %v1281, %v1451
        %v1453 = vpop.f32.mrf.mxu0
        %1454 = vmatprep.mubr.f32.mxu0 0.0
        %1455 = vmatmul.mubr.f32.gmra.mxu0 %v1291
        %v1456 = vpop.f32.mrf.mxu0
        %v1457 = vadd.f32 %v1281, %v1456
        %v1458 = vpop.f32.mrf.mxu0
        %1459 = vmatprep.mubr.f32.mxu0 0.0
        %1460 = vmatmul.mubr.f32.gmra.mxu0 %v1294
        %v1461 = vpop.f32.mrf.mxu0
        %v1462 = vadd.f32 %v1281, %v1461
        %v1463 = vpop.f32.mrf.mxu0
        %1464 = vmatprep.mubr.f32.mxu0 0.0
        %1465 = vmatmul.mubr.f32.gmra.mxu0 %v1297
        %v1466 = vpop.f32.mrf.mxu0
        %v1467 = vadd.f32 %v1281, %v1466
        %v1468 = vpop.f32.mrf.mxu0
        %1469 = vmatprep.mubr.f32.mxu0 0.0
        %1470 = vmatmul.mubr.f32.gmra.mxu0 %v1300
        %v1471 = vpop.f32.mrf.mxu0
        %v1472 = vadd.f32 %v1281, %v1471
        %v1473 = vpop.f32.mrf.mxu0
        %1474 = vmatprep.mubr.f32.mxu0 0.0
        %1475 = vmatmul.mubr.f32.gmra.mxu0 %v1303
        %v1476 = vpop.f32.mrf.mxu0
        %v1477 = vadd.f32 %v1281, %v1476
        %v1478 = vpop.f32.mrf.mxu0
        %1479 = vmatprep.mubr.f32.mxu0 0.0
        %1480 = vmatmul.mubr.f32.gmra.mxu0 %v1306
        %v1481 = vpop.f32.mrf.mxu0
        %v1482 = vadd.f32 %v1281, %v1481
        %v1483 = vpop.f32.mrf.mxu0
        %1484 = vmatprep.mubr.f32.mxu0 0.0
        %1485 = vmatmul.mubr.f32.gmra.mxu0 %v1309
        %v1486 = vpop.f32.mrf.mxu0
        %v1487 = vadd.f32 %v1281, %v1486
        %v1488 = vpop.f32.mrf.mxu0
        %1489 = vmatprep.mubr.f32.mxu0 0.0
        %1490 = vmatmul.mubr.f32.gmra.mxu0 %v1312
        %v1491 = vpop.f32.mrf.mxu0
        %v1492 = vadd.f32 %v1281, %v1491
        %v1493 = vpop.f32.mrf.mxu0
        %1494 = vmatprep.mubr.f32.mxu0 0.0
        %1495 = vmatmul.mubr.f32.gmra.mxu0 %v1315
        %v1496 = vpop.f32.mrf.mxu0
        %v1497 = vadd.f32 %v1281, %v1496
        %v1498 = vpop.f32.mrf.mxu0
        %1499 = vmatprep.mubr.f32.mxu0 0.0
        %1500 = vmatmul.mubr.f32.gmra.mxu0 %v1318
        %v1501 = vpop.f32.mrf.mxu0
        %v1502 = vadd.f32 %v1281, %v1501
        %v1503 = vpop.f32.mrf.mxu0
        %1504 = vmatprep.mubr.f32.mxu0 0.0
        %1505 = vmatmul.mubr.f32.gmra.mxu0 %v1321
        %v1506 = vpop.f32.mrf.mxu0
        %v1507 = vadd.f32 %v1281, %v1506
        %v1508 = vpop.f32.mrf.mxu0
        %1509 = vmatprep.mubr.f32.mxu0 0.0
        %1510 = vmatmul.mubr.f32.gmra.mxu0 %v1324
        %v1511 = vpop.f32.mrf.mxu0
        %v1512 = vadd.f32 %v1281, %v1511
        %v1513 = vpop.f32.mrf.mxu0
        %1514 = vmatprep.mubr.f32.mxu0 0.0
        %1515 = vmatmul.mubr.f32.gmra.mxu0 %v1327
        %v1516 = vpop.f32.mrf.mxu0
        %v1517 = vadd.f32 %v1281, %v1516
        %v1518 = vpop.f32.mrf.mxu0
        %1519 = vmatprep.mubr.f32.mxu0 0.0
        %1520 = vmatmul.mubr.f32.gmra.mxu0 %v1330
        %v1521 = vpop.f32.mrf.mxu0
        %v1522 = vadd.f32 %v1281, %v1521
        %v1523 = vpop.f32.mrf.mxu0
        %1524 = vmatprep.mubr.f32.mxu0 0.0
        %1525 = vmatmul.mubr.f32.gmra.mxu0 %v1333
        %v1526 = vpop.f32.mrf.mxu0
        %v1527 = vadd.f32 %v1281, %v1526
        %v1528 = vpop.f32.mrf.mxu0
        %1529 = vmatprep.mubr.f32.mxu0 0.0
        %1530 = vmatmul.mubr.f32.gmra.mxu0 %v1336
        %v1531 = vpop.f32.mrf.mxu0
        %v1532 = vadd.f32 %v1281, %v1531
        %v1533 = vpop.f32.mrf.mxu0
        %1534 = vmatprep.mubr.f32.mxu0 0.0
        %1535 = vmatmul.mubr.f32.gmra.mxu0 %v1339
        %v1536 = vpop.f32.mrf.mxu0
        %v1537 = vadd.f32 %v1281, %v1536
        %v1538 = vpop.f32.mrf.mxu0
        %1539 = vmatprep.mubr.f32.mxu0 0.0
        %1540 = vmatmul.mubr.f32.gmra.mxu0 %v1342
        %v1541 = vpop.f32.mrf.mxu0
        %v1542 = vadd.f32 %v1281, %v1541
        %v1543 = vpop.f32.mrf.mxu0
        %1544 = vmatprep.mubr.f32.mxu0 0.0
        %1545 = vmatmul.mubr.f32.gmra.mxu0 %v1345
        %v1546 = vpop.f32.mrf.mxu0
        %v1547 = vadd.f32 %v1281, %v1546
        %v1548 = vpop.f32.mrf.mxu0
        %1549 = vmatprep.mubr.f32.mxu0 0.0
        %1550 = vmatmul.mubr.f32.gmra.mxu0 %v1348
        %v1551 = vpop.f32.mrf.mxu0
        %v1552 = vadd.f32 %v1281, %v1551
        %v1553 = vpop.f32.mrf.mxu0
        %1554 = vmatprep.mubr.f32.mxu0 0.0
        %1555 = vmatmul.mubr.f32.gmra.mxu0 %v1351
        %v1556 = vpop.f32.mrf.mxu0
        %v1557 = vadd.f32 %v1281, %v1556
        %v1558 = vpop.f32.mrf.mxu0
        %1559 = vmatprep.mubr.f32.mxu0 0.0
        %1560 = vmatmul.mubr.f32.gmra.mxu0 %v1354
        %v1561 = vpop.f32.mrf.mxu0
        %v1562 = vadd.f32 %v1281, %v1561
        %v1563 = vpop.f32.mrf.mxu0
        %1564 = vmatprep.mubr.f32.mxu0 0.0
        %1565 = vmatmul.mubr.f32.gmra.mxu0 %v1357
        %v1566 = vpop.f32.mrf.mxu0
        %v1567 = vadd.f32 %v1281, %v1566
        %v1568 = vpop.f32.mrf.mxu0
        %1569 = vmatprep.mubr.f32.mxu0 0.0
        %1570 = vmatmul.mubr.f32.gmra.mxu0 %v1360
        %v1571 = vpop.f32.mrf.mxu0
        %v1572 = vadd.f32 %v1281, %v1571
        %v1573 = vpop.f32.mrf.mxu0
        %1574 = vmatprep.mubr.f32.mxu0 0.0
        %1575 = vmatmul.mubr.f32.gmra.mxu0 %v1363
        %v1576 = vpop.f32.mrf.mxu0
        %v1577 = vadd.f32 %v1281, %v1576
        %v1578 = vpop.f32.mrf.mxu0
        %1579 = vmatprep.mubr.f32.mxu0 0.0
        %1580 = vmatmul.mubr.f32.gmra.mxu0 %v1366
        %v1581 = vpop.f32.mrf.mxu0
        %v1582 = vadd.f32 %v1281, %v1581
        %v1583 = vpop.f32.mrf.mxu0
        %1584 = vmatprep.mubr.f32.mxu0 0.0
        %1585 = vmatmul.mubr.f32.gmra.mxu0 %v1369
        %v1586 = vpop.f32.mrf.mxu0
        %v1587 = vadd.f32 %v1281, %v1586
        %v1588 = vpop.f32.mrf.mxu0
        %1589 = vmatprep.mubr.f32.mxu0 0.0
        %1590 = vmatmul.mubr.f32.gmra.mxu0 %v1372
        %v1591 = vpop.f32.mrf.mxu0
        %v1592 = vadd.f32 %v1281, %v1591
        %v1593 = vpop.f32.mrf.mxu0
        %1594 = vmatprep.mubr.f32.mxu0 0.0
        %1595 = vmatmul.mubr.f32.gmra.mxu0 %v1375
        %v1596 = vpop.f32.mrf.mxu0
        %v1597 = vadd.f32 %v1281, %v1596
        %v1598 = vpop.f32.mrf.mxu0
        %1599 = vmatprep.mubr.f32.mxu0 0.0
        %1600 = vmatmul.mubr.f32.gmra.mxu0 %v1378
        %v1601 = vpop.f32.mrf.mxu0
        %v1602 = vadd.f32 %v1281, %v1601
        %v1603 = vpop.f32.mrf.mxu0
        %1604 = vdwg.mxu0
        %v1605 = vmax.f32 %v1447, 0.0
        %v1606 = vmax.f32 %v1452, 0.0
        %v1607 = vmax.f32 %v1457, 0.0
        %v1608 = vmax.f32 %v1462, 0.0
        %v1609 = vmax.f32 %v1467, 0.0
        %v1610 = vmax.f32 %v1472, 0.0
        %v1611 = vmax.f32 %v1477, 0.0
        %v1612 = vmax.f32 %v1482, 0.0
        %v1613 = vmax.f32 %v1487, 0.0
        %v1614 = vmax.f32 %v1492, 0.0
        %v1615 = vmax.f32 %v1497, 0.0
        %v1616 = vmax.f32 %v1502, 0.0
        %v1617 = vmax.f32 %v1507, 0.0
        %v1618 = vmax.f32 %v1512, 0.0
        %v1619 = vmax.f32 %v1517, 0.0
        %v1620 = vmax.f32 %v1522, 0.0
        %v1621 = vmax.f32 %v1527, 0.0
        %v1622 = vmax.f32 %v1532, 0.0
        %v1623 = vmax.f32 %v1537, 0.0
        %v1624 = vmax.f32 %v1542, 0.0
        %v1625 = vmax.f32 %v1547, 0.0
        %v1626 = vmax.f32 %v1552, 0.0
        %v1627 = vmax.f32 %v1557, 0.0
        %v1628 = vmax.f32 %v1562, 0.0
        %v1629 = vmax.f32 %v1567, 0.0
        %v1630 = vmax.f32 %v1572, 0.0
        %v1631 = vmax.f32 %v1577, 0.0
        %v1632 = vmax.f32 %v1582, 0.0
        %v1633 = vmax.f32 %v1587, 0.0
        %v1634 = vmax.f32 %v1592, 0.0
        %v1635 = vmax.f32 %v1597, 0.0
        %v1636 = vmax.f32 %v1602, 0.0
        %v1637 = vld [vmem:[%s8] sm:$0xff]
        %v1638 = vld [vmem:[%s8 + $0x8] sm:$0xff]
        %v1639 = vld [vmem:[%s8 + $0x10] sm:$0xff]
        %v1640 = vld [vmem:[%s8 + $0x18] sm:$0xff]
        %v1641 = vld [vmem:[%s9] sm:$0x1]
        %v1643 = vlaneseq
        %v1644 = vshrl.u32 %v1643, 7
        %v1645 = vsub.s32 0, %v1644
        %v1646 = vrot.slane %v1641, %v1645
        %v1649 = vsel %vm887, %v1605, 0
        %v1652 = vsel %vm887, %v1606, 0
        %v1655 = vsel %vm887, %v1607, 0
        %v1658 = vsel %vm887, %v1608, 0
        %v1661 = vsel %vm887, %v1609, 0
        %v1664 = vsel %vm887, %v1610, 0
        %v1667 = vsel %vm887, %v1611, 0
        %v1670 = vsel %vm887, %v1612, 0
        %v1673 = vsel %vm887, %v1613, 0
        %v1676 = vsel %vm887, %v1614, 0
        %v1679 = vsel %vm887, %v1615, 0
        %v1682 = vsel %vm887, %v1616, 0
        %v1685 = vsel %vm887, %v1617, 0
        %v1688 = vsel %vm887, %v1618, 0
        %v1691 = vsel %vm887, %v1619, 0
        %v1694 = vsel %vm887, %v1620, 0
        %v1697 = vsel %vm887, %v1621, 0
        %v1700 = vsel %vm887, %v1622, 0
        %v1703 = vsel %vm887, %v1623, 0
        %v1706 = vsel %vm887, %v1624, 0
        %v1709 = vsel %vm887, %v1625, 0
        %v1712 = vsel %vm887, %v1626, 0
        %v1715 = vsel %vm887, %v1627, 0
        %v1718 = vsel %vm887, %v1628, 0
        %v1721 = vsel %vm887, %v1629, 0
        %v1724 = vsel %vm887, %v1630, 0
        %v1727 = vsel %vm887, %v1631, 0
        %v1730 = vsel %vm887, %v1632, 0
        %v1733 = vsel %vm887, %v1633, 0
        %v1736 = vsel %vm887, %v1634, 0
        %v1739 = vsel %vm887, %v1635, 0
        %v1742 = vsel %vm887, %v1636, 0
        %1744 = vmatprep.subr.mxu0 0.0
        %1745 = vmatpush1.msra.mxu0 0.0
        %1746 = vmatprep.subr.mxu0 0.0
        %1747 = vmatpush1.msra.mxu0 0.0
        %1748 = vmatprep.subr.mxu0 0.0
        %1749 = vmatpush1.msra.mxu0 0.0
        %1750 = vmatprep.subr.mxu0 0.0
        %1751 = vmatpush1.msra.mxu0 0.0
        %1752 = vmatprep.subr.mxu0 0.0
        %1753 = vmatpush1.msra.mxu0 0.0
        %1754 = vmatprep.subr.mxu0 0.0
        %1755 = vmatpush1.msra.mxu0 0.0
        %1756 = vmatprep.subr.mxu0 0.0
        %1757 = vmatpush1.msra.mxu0 0.0
        %1758 = vmatprep.subr.mxu0 0.0
        %1759 = vmatpush1.msra.mxu0 0.0
        %1760 = vmatprep.subr.mxu0 0.0
        %1761 = vmatpush1.msra.mxu0 0.0
        %1762 = vmatprep.subr.mxu0 0.0
        %1763 = vmatpush1.msra.mxu0 0.0
        %1764 = vmatprep.subr.mxu0 0.0
        %1765 = vmatpush1.msra.mxu0 0.0
        %1766 = vmatprep.subr.mxu0 0.0
        %1767 = vmatpush1.msra.mxu0 0.0
        %1768 = vmatprep.subr.mxu0 0.0
        %1769 = vmatpush1.msra.mxu0 %v1640
        %1770 = vmatprep.subr.mxu0 0.0
        %1771 = vmatpush1.msra.mxu0 %v1639
        %1772 = vmatprep.subr.mxu0 0.0
        %1773 = vmatpush1.msra.mxu0 %v1638
        %1774 = vmatprep.subr.mxu0 0.0
        %1775 = vmatpush1.msra.mxu0 %v1637
        %1776 = vmatprep.subr.mxu0 0.0
        %1777 = vmatpush2.msra.mxu0 0.0
        %1778 = vmatprep.subr.mxu0 0.0
        %1779 = vmatpush2.msra.mxu0 0.0
        %1780 = vmatprep.subr.mxu0 0.0
        %1781 = vmatpush2.msra.mxu0 0.0
        %1782 = vmatprep.subr.mxu0 0.0
        %1783 = vmatpush2.msra.mxu0 0.0
        %1784 = vmatprep.subr.mxu0 0.0
        %1785 = vmatpush2.msra.mxu0 0.0
        %1786 = vmatprep.subr.mxu0 0.0
        %1787 = vmatpush2.msra.mxu0 0.0
        %1788 = vmatprep.subr.mxu0 0.0
        %1789 = vmatpush2.msra.mxu0 0.0
        %1790 = vmatprep.subr.mxu0 0.0
        %1791 = vmatpush2.msra.mxu0 0.0
        %1792 = vmatprep.subr.mxu0 0.0
        %1793 = vmatpush2.msra.mxu0 0.0
        %1794 = vmatprep.subr.mxu0 0.0
        %1795 = vmatpush2.msra.mxu0 0.0
        %1796 = vmatprep.subr.mxu0 0.0
        %1797 = vmatpush2.msra.mxu0 0.0
        %1798 = vmatprep.subr.mxu0 0.0
        %1799 = vmatpush2.msra.mxu0 0.0
        %1800 = vmatprep.subr.mxu0 0.0
        %1801 = vmatpush2.msra.mxu0 0.0
        %1802 = vmatprep.subr.mxu0 0.0
        %1803 = vmatpush2.msra.mxu0 0.0
        %1804 = vmatprep.subr.mxu0 0.0
        %1805 = vmatpush2.msra.mxu0 0.0
        %1806 = vmatprep.subr.mxu0 0.0
        %1807 = vmatpush2.msra.mxu0 0.0
        %1808 = vmatprep.mubr.f32.mxu0 0.0
        %1809 = vmatmul.mubr.f32.gmra.mxu0 %v1649
        %v1810 = vpop.f32.mrf.mxu0
        %v1811 = vadd.f32 %v1646, %v1810
        %v1812 = vpop.f32.mrf.mxu0
        %1813 = vmatprep.mubr.f32.mxu0 0.0
        %1814 = vmatmul.mubr.f32.gmra.mxu0 %v1652
        %v1815 = vpop.f32.mrf.mxu0
        %v1816 = vadd.f32 %v1646, %v1815
        %v1817 = vpop.f32.mrf.mxu0
        %1818 = vmatprep.mubr.f32.mxu0 0.0
        %1819 = vmatmul.mubr.f32.gmra.mxu0 %v1655
        %v1820 = vpop.f32.mrf.mxu0
        %v1821 = vadd.f32 %v1646, %v1820
        %v1822 = vpop.f32.mrf.mxu0
        %1823 = vmatprep.mubr.f32.mxu0 0.0
        %1824 = vmatmul.mubr.f32.gmra.mxu0 %v1658
        %v1825 = vpop.f32.mrf.mxu0
        %v1826 = vadd.f32 %v1646, %v1825
        %v1827 = vpop.f32.mrf.mxu0
        %1828 = vmatprep.mubr.f32.mxu0 0.0
        %1829 = vmatmul.mubr.f32.gmra.mxu0 %v1661
        %v1830 = vpop.f32.mrf.mxu0
        %v1831 = vadd.f32 %v1646, %v1830
        %v1832 = vpop.f32.mrf.mxu0
        %1833 = vmatprep.mubr.f32.mxu0 0.0
        %1834 = vmatmul.mubr.f32.gmra.mxu0 %v1664
        %v1835 = vpop.f32.mrf.mxu0
        %v1836 = vadd.f32 %v1646, %v1835
        %v1837 = vpop.f32.mrf.mxu0
        %1838 = vmatprep.mubr.f32.mxu0 0.0
        %1839 = vmatmul.mubr.f32.gmra.mxu0 %v1667
        %v1840 = vpop.f32.mrf.mxu0
        %v1841 = vadd.f32 %v1646, %v1840
        %v1842 = vpop.f32.mrf.mxu0
        %1843 = vmatprep.mubr.f32.mxu0 0.0
        %1844 = vmatmul.mubr.f32.gmra.mxu0 %v1670
        %v1845 = vpop.f32.mrf.mxu0
        %v1846 = vadd.f32 %v1646, %v1845
        %v1847 = vpop.f32.mrf.mxu0
        %1848 = vmatprep.mubr.f32.mxu0 0.0
        %1849 = vmatmul.mubr.f32.gmra.mxu0 %v1673
        %v1850 = vpop.f32.mrf.mxu0
        %v1851 = vadd.f32 %v1646, %v1850
        %v1852 = vpop.f32.mrf.mxu0
        %1853 = vmatprep.mubr.f32.mxu0 0.0
        %1854 = vmatmul.mubr.f32.gmra.mxu0 %v1676
        %v1855 = vpop.f32.mrf.mxu0
        %v1856 = vadd.f32 %v1646, %v1855
        %v1857 = vpop.f32.mrf.mxu0
        %1858 = vmatprep.mubr.f32.mxu0 0.0
        %1859 = vmatmul.mubr.f32.gmra.mxu0 %v1679
        %v1860 = vpop.f32.mrf.mxu0
        %v1861 = vadd.f32 %v1646, %v1860
        %v1862 = vpop.f32.mrf.mxu0
        %1863 = vmatprep.mubr.f32.mxu0 0.0
        %1864 = vmatmul.mubr.f32.gmra.mxu0 %v1682
        %v1865 = vpop.f32.mrf.mxu0
        %v1866 = vadd.f32 %v1646, %v1865
        %v1867 = vpop.f32.mrf.mxu0
        %1868 = vmatprep.mubr.f32.mxu0 0.0
        %1869 = vmatmul.mubr.f32.gmra.mxu0 %v1685
        %v1870 = vpop.f32.mrf.mxu0
        %v1871 = vadd.f32 %v1646, %v1870
        %v1872 = vpop.f32.mrf.mxu0
        %1873 = vmatprep.mubr.f32.mxu0 0.0
        %1874 = vmatmul.mubr.f32.gmra.mxu0 %v1688
        %v1875 = vpop.f32.mrf.mxu0
        %v1876 = vadd.f32 %v1646, %v1875
        %v1877 = vpop.f32.mrf.mxu0
        %1878 = vmatprep.mubr.f32.mxu0 0.0
        %1879 = vmatmul.mubr.f32.gmra.mxu0 %v1691
        %v1880 = vpop.f32.mrf.mxu0
        %v1881 = vadd.f32 %v1646, %v1880
        %v1882 = vpop.f32.mrf.mxu0
        %1883 = vmatprep.mubr.f32.mxu0 0.0
        %1884 = vmatmul.mubr.f32.gmra.mxu0 %v1694
        %v1885 = vpop.f32.mrf.mxu0
        %v1886 = vadd.f32 %v1646, %v1885
        %v1887 = vpop.f32.mrf.mxu0
        %1888 = vmatprep.mubr.f32.mxu0 0.0
        %1889 = vmatmul.mubr.f32.gmra.mxu0 %v1697
        %v1890 = vpop.f32.mrf.mxu0
        %v1891 = vadd.f32 %v1646, %v1890
        %v1892 = vpop.f32.mrf.mxu0
        %1893 = vmatprep.mubr.f32.mxu0 0.0
        %1894 = vmatmul.mubr.f32.gmra.mxu0 %v1700
        %v1895 = vpop.f32.mrf.mxu0
        %v1896 = vadd.f32 %v1646, %v1895
        %v1897 = vpop.f32.mrf.mxu0
        %1898 = vmatprep.mubr.f32.mxu0 0.0
        %1899 = vmatmul.mubr.f32.gmra.mxu0 %v1703
        %v1900 = vpop.f32.mrf.mxu0
        %v1901 = vadd.f32 %v1646, %v1900
        %v1902 = vpop.f32.mrf.mxu0
        %1903 = vmatprep.mubr.f32.mxu0 0.0
        %1904 = vmatmul.mubr.f32.gmra.mxu0 %v1706
        %v1905 = vpop.f32.mrf.mxu0
        %v1906 = vadd.f32 %v1646, %v1905
        %v1907 = vpop.f32.mrf.mxu0
        %1908 = vmatprep.mubr.f32.mxu0 0.0
        %1909 = vmatmul.mubr.f32.gmra.mxu0 %v1709
        %v1910 = vpop.f32.mrf.mxu0
        %v1911 = vadd.f32 %v1646, %v1910
        %v1912 = vpop.f32.mrf.mxu0
        %1913 = vmatprep.mubr.f32.mxu0 0.0
        %1914 = vmatmul.mubr.f32.gmra.mxu0 %v1712
        %v1915 = vpop.f32.mrf.mxu0
        %v1916 = vadd.f32 %v1646, %v1915
        %v1917 = vpop.f32.mrf.mxu0
        %1918 = vmatprep.mubr.f32.mxu0 0.0
        %1919 = vmatmul.mubr.f32.gmra.mxu0 %v1715
        %v1920 = vpop.f32.mrf.mxu0
        %v1921 = vadd.f32 %v1646, %v1920
        %v1922 = vpop.f32.mrf.mxu0
        %1923 = vmatprep.mubr.f32.mxu0 0.0
        %1924 = vmatmul.mubr.f32.gmra.mxu0 %v1718
        %v1925 = vpop.f32.mrf.mxu0
        %v1926 = vadd.f32 %v1646, %v1925
        %v1927 = vpop.f32.mrf.mxu0
        %1928 = vmatprep.mubr.f32.mxu0 0.0
        %1929 = vmatmul.mubr.f32.gmra.mxu0 %v1721
        %v1930 = vpop.f32.mrf.mxu0
        %v1931 = vadd.f32 %v1646, %v1930
        %v1932 = vpop.f32.mrf.mxu0
        %1933 = vmatprep.mubr.f32.mxu0 0.0
        %1934 = vmatmul.mubr.f32.gmra.mxu0 %v1724
        %v1935 = vpop.f32.mrf.mxu0
        %v1936 = vadd.f32 %v1646, %v1935
        %v1937 = vpop.f32.mrf.mxu0
        %1938 = vmatprep.mubr.f32.mxu0 0.0
        %1939 = vmatmul.mubr.f32.gmra.mxu0 %v1727
        %v1940 = vpop.f32.mrf.mxu0
        %v1941 = vadd.f32 %v1646, %v1940
        %v1942 = vpop.f32.mrf.mxu0
        %1943 = vmatprep.mubr.f32.mxu0 0.0
        %1944 = vmatmul.mubr.f32.gmra.mxu0 %v1730
        %v1945 = vpop.f32.mrf.mxu0
        %v1946 = vadd.f32 %v1646, %v1945
        %v1947 = vpop.f32.mrf.mxu0
        %1948 = vmatprep.mubr.f32.mxu0 0.0
        %1949 = vmatmul.mubr.f32.gmra.mxu0 %v1733
        %v1950 = vpop.f32.mrf.mxu0
        %v1951 = vadd.f32 %v1646, %v1950
        %v1952 = vpop.f32.mrf.mxu0
        %1953 = vmatprep.mubr.f32.mxu0 0.0
        %1954 = vmatmul.mubr.f32.gmra.mxu0 %v1736
        %v1955 = vpop.f32.mrf.mxu0
        %v1956 = vadd.f32 %v1646, %v1955
        %v1957 = vpop.f32.mrf.mxu0
        %1958 = vmatprep.mubr.f32.mxu0 0.0
        %1959 = vmatmul.mubr.f32.gmra.mxu0 %v1739
        %v1960 = vpop.f32.mrf.mxu0
        %v1961 = vadd.f32 %v1646, %v1960
        %v1962 = vpop.f32.mrf.mxu0
        %1963 = vmatprep.mubr.f32.mxu0 0.0
        %1964 = vmatmul.mubr.f32.gmra.mxu0 %v1742
        %v1965 = vpop.f32.mrf.mxu0
        %v1966 = vadd.f32 %v1646, %v1965
        %v1967 = vpop.f32.mrf.mxu0
        %1968 = vdwg.mxu0
        %v1969 = vld [vmem:[%s10] sm:$0xff]
        %v1970 = vld [vmem:[%s10 + $0x8] sm:$0xff]
        %v1971 = vld [vmem:[%s10 + $0x10] sm:$0xff]
        %v1972 = vld [vmem:[%s10 + $0x18] sm:$0xff]
        %v1973 = vld [vmem:[%s10 + $0x20] sm:$0xff]
        %v1974 = vld [vmem:[%s10 + $0x28] sm:$0xff]
        %v1975 = vld [vmem:[%s10 + $0x30] sm:$0xff]
        %v1976 = vld [vmem:[%s10 + $0x38] sm:$0xff]
        %v1978 = vsel %vm887, %v1969, 0
        %v1981 = vsel %vm887, %v1970, 0
        %v1984 = vsel %vm887, %v1971, 0
        %v1987 = vsel %vm887, %v1972, 0
        %v1990 = vsel %vm887, %v1973, 0
        %v1993 = vsel %vm887, %v1974, 0
        %v1996 = vsel %vm887, %v1975, 0
        %v1999 = vsel %vm887, %v1976, 0
        %v2002 = vsel %vm887, %v1811, 0
        %v2005 = vsel %vm887, %v1816, 0
        %v2008 = vsel %vm887, %v1821, 0
        %v2011 = vsel %vm887, %v1826, 0
        %v2014 = vsel %vm887, %v1831, 0
        %v2017 = vsel %vm887, %v1836, 0
        %v2020 = vsel %vm887, %v1841, 0
        %v2023 = vsel %vm887, %v1846, 0
        %v2026 = vsel %vm887, %v1851, 0
        %v2029 = vsel %vm887, %v1856, 0
        %v2032 = vsel %vm887, %v1861, 0
        %v2035 = vsel %vm887, %v1866, 0
        %v2038 = vsel %vm887, %v1871, 0
        %v2041 = vsel %vm887, %v1876, 0
        %v2044 = vsel %vm887, %v1881, 0
        %v2047 = vsel %vm887, %v1886, 0
        %v2050 = vsel %vm887, %v1891, 0
        %v2053 = vsel %vm887, %v1896, 0
        %v2056 = vsel %vm887, %v1901, 0
        %v2059 = vsel %vm887, %v1906, 0
        %v2062 = vsel %vm887, %v1911, 0
        %v2065 = vsel %vm887, %v1916, 0
        %v2068 = vsel %vm887, %v1921, 0
        %v2071 = vsel %vm887, %v1926, 0
        %v2074 = vsel %vm887, %v1931, 0
        %v2077 = vsel %vm887, %v1936, 0
        %v2080 = vsel %vm887, %v1941, 0
        %v2083 = vsel %vm887, %v1946, 0
        %v2086 = vsel %vm887, %v1951, 0
        %v2089 = vsel %vm887, %v1956, 0
        %v2092 = vsel %vm887, %v1961, 0
        %v2095 = vsel %vm887, %v1966, 0
        %2097 = vmatprep.subr.mxu0 0.0
        %2098 = vmatpush1.xpose.msra.mxu0 %v2047
        %2099 = vmatprep.subr.mxu0 0.0
        %2100 = vmatpush1.xpose.msra.mxu0 %v2044
        %2101 = vmatprep.subr.mxu0 0.0
        %2102 = vmatpush1.xpose.msra.mxu0 %v2041
        %2103 = vmatprep.subr.mxu0 0.0
        %2104 = vmatpush1.xpose.msra.mxu0 %v2038
        %2105 = vmatprep.subr.mxu0 0.0
        %2106 = vmatpush1.xpose.msra.mxu0 %v2035
        %2107 = vmatprep.subr.mxu0 0.0
        %2108 = vmatpush1.xpose.msra.mxu0 %v2032
        %2109 = vmatprep.subr.mxu0 0.0
        %2110 = vmatpush1.xpose.msra.mxu0 %v2029
        %2111 = vmatprep.subr.mxu0 0.0
        %2112 = vmatpush1.xpose.msra.mxu0 %v2026
        %2113 = vmatprep.subr.mxu0 0.0
        %2114 = vmatpush1.xpose.msra.mxu0 %v2023
        %2115 = vmatprep.subr.mxu0 0.0
        %2116 = vmatpush1.xpose.msra.mxu0 %v2020
        %2117 = vmatprep.subr.mxu0 0.0
        %2118 = vmatpush1.xpose.msra.mxu0 %v2017
        %2119 = vmatprep.subr.mxu0 0.0
        %2120 = vmatpush1.xpose.msra.mxu0 %v2014
        %2121 = vmatprep.subr.mxu0 0.0
        %2122 = vmatpush1.xpose.msra.mxu0 %v2011
        %2123 = vmatprep.subr.mxu0 0.0
        %2124 = vmatpush1.xpose.msra.mxu0 %v2008
        %2125 = vmatprep.subr.mxu0 0.0
        %2126 = vmatpush1.xpose.msra.mxu0 %v2005
        %2127 = vmatprep.subr.mxu0 0.0
        %2128 = vmatpush1.xpose.msra.mxu0 %v2002
        %2129 = vmatprep.subr.mxu0 0.0
        %2130 = vmatpush2.xpose.msra.mxu0 %v2095
        %2131 = vmatprep.subr.mxu0 0.0
        %2132 = vmatpush2.xpose.msra.mxu0 %v2092
        %2133 = vmatprep.subr.mxu0 0.0
        %2134 = vmatpush2.xpose.msra.mxu0 %v2089
        %2135 = vmatprep.subr.mxu0 0.0
        %2136 = vmatpush2.xpose.msra.mxu0 %v2086
        %2137 = vmatprep.subr.mxu0 0.0
        %2138 = vmatpush2.xpose.msra.mxu0 %v2083
        %2139 = vmatprep.subr.mxu0 0.0
        %2140 = vmatpush2.xpose.msra.mxu0 %v2080
        %2141 = vmatprep.subr.mxu0 0.0
        %2142 = vmatpush2.xpose.msra.mxu0 %v2077
        %2143 = vmatprep.subr.mxu0 0.0
        %2144 = vmatpush2.xpose.msra.mxu0 %v2074
        %2145 = vmatprep.subr.mxu0 0.0
        %2146 = vmatpush2.xpose.msra.mxu0 %v2071
        %2147 = vmatprep.subr.mxu0 0.0
        %2148 = vmatpush2.xpose.msra.mxu0 %v2068
        %2149 = vmatprep.subr.mxu0 0.0
        %2150 = vmatpush2.xpose.msra.mxu0 %v2065
        %2151 = vmatprep.subr.mxu0 0.0
        %2152 = vmatpush2.xpose.msra.mxu0 %v2062
        %2153 = vmatprep.subr.mxu0 0.0
        %2154 = vmatpush2.xpose.msra.mxu0 %v2059
        %2155 = vmatprep.subr.mxu0 0.0
        %2156 = vmatpush2.xpose.msra.mxu0 %v2056
        %2157 = vmatprep.subr.mxu0 0.0
        %2158 = vmatpush2.xpose.msra.mxu0 %v2053
        %2159 = vmatprep.subr.mxu0 0.0
        %2160 = vmatpush2.xpose.msra.mxu0 %v2050
        %2161 = vmatprep.mubr.f32.mxu0 0.0
        %2162 = vmatmul.mubr.f32.gmra.mxu0 %v1978
        %v2163 = vpop.f32.mrf.mxu0
        %v2164 = vadd.f32 0.0, %v2163
        %v2165 = vpop.f32.mrf.mxu0
        %v2166 = vadd.f32 0.0, %v2165
        %2167 = vmatprep.mubr.f32.mxu0 0.0
        %2168 = vmatmul.mubr.f32.gmra.mxu0 %v1981
        %v2169 = vpop.f32.mrf.mxu0
        %v2170 = vadd.f32 0.0, %v2169
        %v2171 = vpop.f32.mrf.mxu0
        %v2172 = vadd.f32 0.0, %v2171
        %2173 = vmatprep.mubr.f32.mxu0 0.0
        %2174 = vmatmul.mubr.f32.gmra.mxu0 %v1984
        %v2175 = vpop.f32.mrf.mxu0
        %v2176 = vadd.f32 0.0, %v2175
        %v2177 = vpop.f32.mrf.mxu0
        %v2178 = vadd.f32 0.0, %v2177
        %2179 = vmatprep.mubr.f32.mxu0 0.0
        %2180 = vmatmul.mubr.f32.gmra.mxu0 %v1987
        %v2181 = vpop.f32.mrf.mxu0
        %v2182 = vadd.f32 0.0, %v2181
        %v2183 = vpop.f32.mrf.mxu0
        %v2184 = vadd.f32 0.0, %v2183
        %2185 = vmatprep.mubr.f32.mxu0 0.0
        %2186 = vmatmul.mubr.f32.gmra.mxu0 %v1990
        %v2187 = vpop.f32.mrf.mxu0
        %v2188 = vadd.f32 0.0, %v2187
        %v2189 = vpop.f32.mrf.mxu0
        %v2190 = vadd.f32 0.0, %v2189
        %2191 = vmatprep.mubr.f32.mxu0 0.0
        %2192 = vmatmul.mubr.f32.gmra.mxu0 %v1993
        %v2193 = vpop.f32.mrf.mxu0
        %v2194 = vadd.f32 0.0, %v2193
        %v2195 = vpop.f32.mrf.mxu0
        %v2196 = vadd.f32 0.0, %v2195
        %2197 = vmatprep.mubr.f32.mxu0 0.0
        %2198 = vmatmul.mubr.f32.gmra.mxu0 %v1996
        %v2199 = vpop.f32.mrf.mxu0
        %v2200 = vadd.f32 0.0, %v2199
        %v2201 = vpop.f32.mrf.mxu0
        %v2202 = vadd.f32 0.0, %v2201
        %2203 = vmatprep.mubr.f32.mxu0 0.0
        %2204 = vmatmul.mubr.f32.gmra.mxu0 %v1999
        %v2205 = vpop.f32.mrf.mxu0
        %v2206 = vadd.f32 0.0, %v2205
        %v2207 = vpop.f32.mrf.mxu0
        %v2208 = vadd.f32 0.0, %v2207
        %2209 = vdwg.mxu0
        %v2210 = vld [vmem:[%s11] sm:$0xff]
        %v2211 = vld [vmem:[%s11 + $0x8] sm:$0xff]
        %v2212 = vld [vmem:[%s11 + $0x10] sm:$0xff]
        %v2213 = vld [vmem:[%s11 + $0x18] sm:$0xff]
        %v2214 = vld [vmem:[%s11 + $0x20] sm:$0xff]
        %v2215 = vld [vmem:[%s11 + $0x28] sm:$0xff]
        %v2216 = vld [vmem:[%s11 + $0x30] sm:$0xff]
        %v2217 = vld [vmem:[%s11 + $0x38] sm:$0xff]
        %v2218 = vmul.f32 %v2164, 2.0
        %v2219 = vmul.f32 %v2166, 2.0
        %v2220 = vmul.f32 %v2170, 2.0
        %v2221 = vmul.f32 %v2172, 2.0
        %v2222 = vmul.f32 %v2176, 2.0
        %v2223 = vmul.f32 %v2178, 2.0
        %v2224 = vmul.f32 %v2182, 2.0
        %v2225 = vmul.f32 %v2184, 2.0
        %v2226 = vmul.f32 %v2188, 2.0
        %v2227 = vmul.f32 %v2190, 2.0
        %v2228 = vmul.f32 %v2194, 2.0
        %v2229 = vmul.f32 %v2196, 2.0
        %v2230 = vmul.f32 %v2200, 2.0
        %v2231 = vmul.f32 %v2202, 2.0
        %v2232 = vmul.f32 %v2206, 2.0
        %v2233 = vmul.f32 %v2208, 2.0
        %2235 = vset.pattern.permute.xlu0 0
        %2236 = vperm.xlu0 %2235, %v2210
        %v2237 = vpop.permute.xlu0 %2236
        %2240 = vset.pattern.permute.xlu0 0
        %2241 = vperm.xlu0 %2240, %v2211
        %v2242 = vpop.permute.xlu0 %2241
        %2245 = vset.pattern.permute.xlu0 0
        %2246 = vperm.xlu0 %2245, %v2212
        %v2247 = vpop.permute.xlu0 %2246
        %2250 = vset.pattern.permute.xlu0 0
        %2251 = vperm.xlu0 %2250, %v2213
        %v2252 = vpop.permute.xlu0 %2251
        %2255 = vset.pattern.permute.xlu0 0
        %2256 = vperm.xlu0 %2255, %v2214
        %v2257 = vpop.permute.xlu0 %2256
        %2260 = vset.pattern.permute.xlu0 0
        %2261 = vperm.xlu0 %2260, %v2215
        %v2262 = vpop.permute.xlu0 %2261
        %2265 = vset.pattern.permute.xlu0 0
        %2266 = vperm.xlu0 %2265, %v2216
        %v2267 = vpop.permute.xlu0 %2266
        %2270 = vset.pattern.permute.xlu0 0
        %2271 = vperm.xlu0 %2270, %v2217
        %v2272 = vpop.permute.xlu0 %2271
        %v2274 = vsub.f32 %v2237, %v2218
        %v2275 = vsub.f32 %v2237, %v2219
        %v2276 = vsub.f32 %v2242, %v2220
        %v2277 = vsub.f32 %v2242, %v2221
        %v2278 = vsub.f32 %v2247, %v2222
        %v2279 = vsub.f32 %v2247, %v2223
        %v2280 = vsub.f32 %v2252, %v2224
        %v2281 = vsub.f32 %v2252, %v2225
        %v2282 = vsub.f32 %v2257, %v2226
        %v2283 = vsub.f32 %v2257, %v2227
        %v2284 = vsub.f32 %v2262, %v2228
        %v2285 = vsub.f32 %v2262, %v2229
        %v2286 = vsub.f32 %v2267, %v2230
        %v2287 = vsub.f32 %v2267, %v2231
        %v2288 = vsub.f32 %v2272, %v2232
        %v2289 = vsub.f32 %v2272, %v2233
        %v2290 = vmin.f32 %v2274, %v2278
        %v2291 = vmin.f32 %v2276, %v2280
        %v2292 = vmin.f32 %v2290, %v2282
        %v2293 = vmin.f32 %v2291, %v2284
        %v2294 = vmin.f32 %v2292, %v2286
        %v2295 = vmin.f32 %v2293, %v2288
        %v2296 = vmin.f32 %v2294, %v2295
        %v2297 = vrot.slane %v2296, 4
        %v2298 = vmin.f32 %v2296, %v2297
        %v2299 = vrot.slane %v2298, 2
        %v2300 = vmin.f32 %v2298, %v2299
        %v2301 = vrot.slane %v2300, 1
        %v2302 = vmin.f32 %v2300, %v2301
        %v2303 = vmin.f32 %v2275, %v2279
        %v2304 = vmin.f32 %v2277, %v2281
        %v2305 = vmin.f32 %v2303, %v2283
        %v2306 = vmin.f32 %v2304, %v2285
        %v2307 = vmin.f32 %v2305, %v2287
        %v2308 = vmin.f32 %v2306, %v2289
        %v2309 = vmin.f32 %v2307, %v2308
        %v2310 = vrot.slane %v2309, 4
        %v2311 = vmin.f32 %v2309, %v2310
        %v2312 = vrot.slane %v2311, 2
        %v2313 = vmin.f32 %v2311, %v2312
        %v2314 = vrot.slane %v2313, 1
        %v2315 = vmin.f32 %v2313, %v2314
        %v2316 = vlaneseq
        %v2317 = vshrl.u32 %v2316, 7
        %v2318 = vadd.s32 %v2317, 8
        %v2319 = vadd.s32 %v2317, 16
        %v2320 = vadd.s32 %v2317, 24
        %v2321 = vadd.s32 %v2317, 32
        %v2322 = vadd.s32 %v2317, 40
        %v2323 = vadd.s32 %v2317, 48
        %v2324 = vadd.s32 %v2317, 56
        %v2325 = vcvt.s32.f32 %v2317
        %v2326 = vcvt.s32.f32 %v2318
        %v2327 = vcvt.s32.f32 %v2319
        %v2328 = vcvt.s32.f32 %v2320
        %v2329 = vcvt.s32.f32 %v2321
        %v2330 = vcvt.s32.f32 %v2322
        %v2331 = vcvt.s32.f32 %v2323
        %v2332 = vcvt.s32.f32 %v2324
        %vm2333 = vcmp.le.f32.partialorder %v2274, %v2302
        %vm2334 = vcmp.le.f32.partialorder %v2275, %v2315
        %vm2335 = vcmp.le.f32.partialorder %v2276, %v2302
        %vm2336 = vcmp.le.f32.partialorder %v2277, %v2315
        %vm2337 = vcmp.le.f32.partialorder %v2278, %v2302
        %vm2338 = vcmp.le.f32.partialorder %v2279, %v2315
        %vm2339 = vcmp.le.f32.partialorder %v2280, %v2302
        %vm2340 = vcmp.le.f32.partialorder %v2281, %v2315
        %vm2341 = vcmp.le.f32.partialorder %v2282, %v2302
        %vm2342 = vcmp.le.f32.partialorder %v2283, %v2315
        %vm2343 = vcmp.le.f32.partialorder %v2284, %v2302
        %vm2344 = vcmp.le.f32.partialorder %v2285, %v2315
        %vm2345 = vcmp.le.f32.partialorder %v2286, %v2302
        %vm2346 = vcmp.le.f32.partialorder %v2287, %v2315
        %vm2347 = vcmp.le.f32.partialorder %v2288, %v2302
        %vm2348 = vcmp.le.f32.partialorder %v2289, %v2315
        %v2349 = vsel %vm2333, %v2325, 64.0
        %v2350 = vsel %vm2334, %v2325, 64.0
        %v2351 = vsel %vm2335, %v2326, 64.0
        %v2352 = vsel %vm2336, %v2326, 64.0
        %v2353 = vsel %vm2337, %v2327, 64.0
        %v2354 = vsel %vm2338, %v2327, 64.0
        %v2355 = vsel %vm2339, %v2328, 64.0
        %v2356 = vsel %vm2340, %v2328, 64.0
        %v2357 = vsel %vm2341, %v2329, 64.0
        %v2358 = vsel %vm2342, %v2329, 64.0
        %v2359 = vsel %vm2343, %v2330, 64.0
        %v2360 = vsel %vm2344, %v2330, 64.0
        %v2361 = vsel %vm2345, %v2331, 64.0
        %v2362 = vsel %vm2346, %v2331, 64.0
        %v2363 = vsel %vm2347, %v2332, 64.0
        %v2364 = vsel %vm2348, %v2332, 64.0
        %v2365 = vmin.f32 %v2349, %v2353
        %v2366 = vmin.f32 %v2351, %v2355
        %v2367 = vmin.f32 %v2365, %v2357
        %v2368 = vmin.f32 %v2366, %v2359
        %v2369 = vmin.f32 %v2367, %v2361
        %v2370 = vmin.f32 %v2368, %v2363
        %v2371 = vmin.f32 %v2369, %v2370
        %v2372 = vrot.slane %v2371, 4
        %v2373 = vmin.f32 %v2371, %v2372
        %v2374 = vrot.slane %v2373, 2
        %v2375 = vmin.f32 %v2373, %v2374
        %v2376 = vrot.slane %v2375, 1
        %v2377 = vmin.f32 %v2375, %v2376
        %v2378 = vmin.f32 %v2350, %v2354
        %v2379 = vmin.f32 %v2352, %v2356
        %v2380 = vmin.f32 %v2378, %v2358
        %v2381 = vmin.f32 %v2379, %v2360
        %v2382 = vmin.f32 %v2380, %v2362
        %v2383 = vmin.f32 %v2381, %v2364
        %v2384 = vmin.f32 %v2382, %v2383
        %v2385 = vrot.slane %v2384, 4
        %v2386 = vmin.f32 %v2384, %v2385
        %v2387 = vrot.slane %v2386, 2
        %v2388 = vmin.f32 %v2386, %v2387
        %v2389 = vrot.slane %v2388, 1
        %v2390 = vmin.f32 %v2388, %v2389
        %v2391 = vcvt.f32.s32.to.zero.pseudo %v2377
        %v2392 = vcvt.f32.s32.to.zero.pseudo %v2390
        %vm2393 = vcmp.lt.s32.totalorder %v2391, 63
        %v2394 = vsel %vm2393, %v2391, 63
        %vm2395 = vcmp.lt.s32.totalorder %v2392, 63
        %v2396 = vsel %vm2395, %v2392, 63
        %v2397 = vcombine.low %v2394, %v2396
        %v2399 = vunpack.c.l.s4 1966171168
        %v2400 = vunpack.c.0.s8 %v2399
        %v2401 = vlaneseq
        %v2402 = vshrl.u32 %v2401, 7
        %v2403 = vsub.s32 %v2400, %v2402
        %v2404 = vrot.slane %v2397, %v2403
        %v2406 = vunpack.c.l.s4 1966171168
        %v2407 = vunpack.c.0.s8 %v2406
        %v2408 = vlaneseq
        %v2409 = vshrl.u32 %v2408, 7
        %v2410 = vsub.s32 %v2407, %v2409
        %v2411 = vrot.slane %v2404, %v2410
        %v2412 = vlaneseq
        %vm2413 = vcmp.ge.s32.totalorder %v2412, 0
        %vm2414 = vcmp.lt.s32.totalorder %v2412, 256
        %vm2415 = vmand %vm2413, %vm2414
        %2416 = vst.msk [vmem:[%s458] sm:$0x3] %vm2415, %v2411
        %s2417 = smul.u32 32, %s28
        %p2418 = scmp.lt.s32.totalorder %s2417, 63
        %s2419 = scalar_select %p2418, %s2417, 63
        %s2420 = smul.addr %s2419, 8
        %s2421 = scalar_lea.vmem %s12, %s2420
        %s2422 = sand.u32 %s324, 1
        %s2423 = scalar_lea.sflag [#allocation3], %s2422
        %s2424 = sand.u32 %s324, 1
        %s2425 = smul.addr %s2424, 2
        %s2426 = scalar_lea.vmem [#allocation2], %s2425
        // Predicated region
        $region69: #{lr_generator16_forward.1} parent=67 // pred_check
          %p2427 = pneg %p308
        $region70: #{lr_generator16_forward.1} parent=67 // pred_check_branch
          %2429 = sbr.rel (%p2427) target = $region72
        $region71: #{lr_generator16_forward.1} parent=67 // pred_region
          %s2430 = smul.u32 32, %s28
        $region72: #{lr_generator16_forward.1} parent=67 // pred_fallthru
          _
        // Predicated region
        $region73: #{lr_generator16_forward.1} parent=67 // pred_check
          %p2431 = pneg %p334
        $region74: #{lr_generator16_forward.1} parent=67 // pred_check_branch
          %2433 = sbr.rel (%p2431) target = $region76
        $region75: #{lr_generator16_forward.1} parent=67 // pred_region
          %s2435 = ssub.s32 32, 32
          %2436 = vsyncadd %s2423, %s2435
          %s2437 = smul.addr %s28, 2
          %s2438 = smul.addr %s2437, 16
          %s2439 = scalar_lea.hbm %s13, %s2438
          %s2441 = sshll.u32 %s2426, 4
          %s2442 = int_to_ptr.vmem [resolvable:$true] %s2441
          %2444 = dma.vmem_to_hbm [thread:$0]  %s2442, 32, %s2439, %s2423
        $region76: #{lr_generator16_forward.1} parent=67 // pred_fallthru
          _
      $region68: #{lr_generator16_forward.1} parent=5 // pred_fallthru
        _
      %p2445 = scmp.le.s32.totalorder 2, %s23
      // Predicated region
      $region77: #{lr_generator16_forward.1} parent=5 // pred_check
        %p2446 = pneg %p2445
      $region78: #{lr_generator16_forward.1} parent=5 // pred_check_branch
        %2448 = sbr.rel (%p2446) target = $region80
      $region79: #{lr_generator16_forward.1} parent=5 // pred_region
        %s2449 = ssub.s32 %s23, 2
        // Predicated region
        $region81: #{lr_generator16_forward.1} parent=79 // pred_check
          %p2450 = pneg %p314
        $region82: #{lr_generator16_forward.1} parent=79 // pred_check_branch
          %2452 = sbr.rel (%p2450) target = $region84
        $region83: #{lr_generator16_forward.1} parent=79 // pred_region
          %s2453 = smul.u32 32, %s29
          %p2454 = scmp.lt.s32.totalorder %s2453, 63
          %s2455 = scalar_select %p2454, %s2453, 63
          %s2456 = smul.addr %s2455, 8
          %s2457 = scalar_lea.vmem %s12, %s2456
        $region84: #{lr_generator16_forward.1} parent=79 // pred_fallthru
          _
        // Predicated region
        $region85: #{lr_generator16_forward.1} parent=79 // pred_check
          %p2458 = pneg %p340
        $region86: #{lr_generator16_forward.1} parent=79 // pred_check_branch
          %2460 = sbr.rel (%p2458) target = $region88
        $region87: #{lr_generator16_forward.1} parent=79 // pred_region
          %s2461 = sand.u32 %s325, 1
          %s2462 = scalar_lea.sflag [#allocation3], %s2461
          %s2463 = sand.u32 %s325, 1
          %s2464 = smul.addr %s2463, 2
          %s2465 = scalar_lea.vmem [#allocation2], %s2464
          %2466 = dma.done %s2462, 32
        $region88: #{lr_generator16_forward.1} parent=79 // pred_fallthru
          _
      $region80: #{lr_generator16_forward.1} parent=5 // pred_fallthru
        _
    $region6: #{lr_generator16_forward.1} parent=1 // loop_footer
      %s27 = sadd.s32 1, %s23
    $region7: #{lr_generator16_forward.1} parent=1 // loop_footer_branch
      %22 = sbr.rel target = $region3
    $region8: #{lr_generator16_forward.1} parent=1 // loop_exit
      _
    %2467 = vsyncpa [#allocation3], 1
    %s2468 = scalar_lea.sflag [#allocation3], 1
    %2469 = vsyncpa %s2468, 1

</llo_original>
